<compile_context>
chip_gen: v6e
topology: v6e:2x2x1
jax: 0.10.0
libtpu: 0.0.40
codegen_flags: <defaults>
</compile_context>

<pallas_src>
import numpy as np
import jax
import jax.numpy as jnp
from jax.experimental import pallas as pl
from jax.experimental.pallas import tpu as pltpu


# ----------------------------------------------------------------------------
# cv2.getGaussianKernel replica (deterministic parameter init, no files)
# ----------------------------------------------------------------------------
def _cv2_gaussian_kernel_1d(ksize: int, sigma: float) -> np.ndarray:
    small_tab = {
        1: [1.0],
        3: [0.25, 0.5, 0.25],
        5: [0.0625, 0.25, 0.375, 0.25, 0.0625],
        7: [0.03125, 0.109375, 0.21875, 0.28125, 0.21875, 0.109375, 0.03125],
    }
    if sigma <= 0 and ksize in small_tab:
        return np.asarray(small_tab[ksize], dtype=np.float64)
    if sigma <= 0:
        sigma = 0.3 * ((ksize - 1) * 0.5 - 1) + 0.8
    x = np.arange(ksize, dtype=np.float64) - (ksize - 1) * 0.5
    kern = np.exp(-(x * x) / (2.0 * sigma * sigma))
    return kern / kern.sum()


def _blur_matrix(n: int, k1: np.ndarray) -> np.ndarray:
    """(n, n) matrix M such that (M @ v) equals the 1-D cross-correlation of v
    with taps k1 under F.pad(..., mode='reflect') boundary handling."""
    k = int(k1.shape[0])
    p = k // 2
    assert n > p, "reflect padding requires dim > k//2"
    m = np.zeros((n, n), dtype=np.float64)
    for i in range(n):
        for t in range(k):
            j = i + t - p
            if j < 0:
                j = -j
            elif j >= n:
                j = 2 * (n - 1) - j
            m[i, j] += k1[t]
    return m


# ----------------------------------------------------------------------------
# Fused Pallas kernel
# ----------------------------------------------------------------------------
def _make_usm_kernel(P: int, H: int, W: int, weight: float, threshold: float):
    def kernel(bv_ref, bh_ref, x_ref, out_ref):
        x = x_ref[...]                                     # (P, H, W) f32

        # Broadcast the shared blur matrices once (hoisted; reused by both
        # blur calls) so both passes are plain batched MXU matmuls.
        bvb = jnp.broadcast_to(bv_ref[...], (P, H, H))     # (P, H, H)
        bhb = jnp.broadcast_to(bh_ref[...], (P, W, W))     # (P, W, W)

        def blur(t):
            # Horizontal pass: t1[p,h,j] = sum_w t[p,h,w] * BH[j,w]
            t1 = jnp.einsum('phw,pjw->phj', t, bhb,
                            preferred_element_type=jnp.float32)
            # Vertical pass:   out[p,i,j] = sum_h BV[i,h] * t1[p,h,j]
            return jnp.einsum('pih,phj->pij', bvb, t1,
                              preferred_element_type=jnp.float32)

        blur_x = blur(x)
        res = x - blur_x
        mask = (jnp.abs(res) * jnp.float32(255.0)
                > jnp.float32(threshold)).astype(jnp.float32)
        sharp = jnp.clip(x + jnp.float32(weight) * res, 0.0, 1.0)
        soft = blur(mask)
        out_ref[...] = soft * sharp + (1.0 - soft) * x

    return kernel


# ----------------------------------------------------------------------------
# Wrapper
# ----------------------------------------------------------------------------
def usm_sharp(img_nchw, kernel1d, weight=0.5, threshold=10.0):
    """USMSharp forward.  img_nchw: (B, C, H, W) in [0,1]; kernel1d: (k,) taps."""
    b, c, h, w = img_nchw.shape
    k1 = np.asarray(kernel1d, dtype=np.float64).reshape(-1)
    k = int(k1.shape[0])
    p = k // 2
    assert k % 2 == 1, "kernel size must be odd"
    assert h > p and w > p, "reflect padding requires H, W > k//2"
    bc = b * c

    x = img_nchw.reshape(bc, h, w).astype(jnp.float32)

    # Fold reflect padding + 1-D Gaussian taps into dense (H,H)/(W,W) matrices.
    bv = jnp.asarray(_blur_matrix(h, k1), dtype=jnp.float32)   # vertical pass
    bh = jnp.asarray(_blur_matrix(w, k1), dtype=jnp.float32)   # horizontal pass

    # Planes (B*C slices) per grid step: largest divisor of bc whose in-kernel
    # working set stays inside a conservative per-block budget.
    per_plane_bytes = 4 * (12 * h * w + h * h + w * w)
    budget = 4 << 20
    planes = 1
    for cand in range(1, bc + 1):
        if bc % cand == 0 and cand * per_plane_bytes <= budget:
            planes = cand

    vmem_limit = int(min(48 << 20,
                         max(16 << 20,
                             4 * planes * per_plane_bytes
                             + 8 * (h * h + w * w))))

    plane_spec = pl.BlockSpec((planes, h, w), lambda n: (n, 0, 0))
    mat_v_spec = pl.BlockSpec((h, h), lambda n: (0, 0))   # constant -> DMA'd once
    mat_h_spec = pl.BlockSpec((w, w), lambda n: (0, 0))   # constant -> DMA'd once

    out = pl.pallas_call(
        _make_usm_kernel(planes, h, w, float(weight), float(threshold)),
        grid=(bc // planes,),
        in_specs=[mat_v_spec, mat_h_spec, plane_spec],
        out_specs=plane_spec,
        out_shape=jax.ShapeDtypeStruct((bc, h, w), jnp.float32),
        compiler_params=pltpu.CompilerParams(
            dimension_semantics=("parallel",),
            vmem_limit_bytes=vmem_limit),
    )(bv, bh, x)

    return out.reshape(b, c, h, w)


# ----------------------------------------------------------------------------
if __name__ == "__main__":
    # USMSharp's default radius=51 needs H, W >= 26 for reflect padding; the
    # 16x16 demo uses the module's radius argument with a small odd radius.
    radius = 5
    sigma = 0
    k1 = _cv2_gaussian_kernel_1d(radius, sigma)

    key = jax.random.PRNGKey(0)
    img = jax.random.uniform(key, (2, 4, 16, 16), dtype=jnp.float32)  # NCHW [0,1]

    out = usm_sharp(img, k1, weight=0.5, threshold=10.0)
    jax.block_until_ready(out)
    assert out.shape == img.shape and out.dtype == jnp.float32
    assert bool(jnp.all(jnp.isfinite(out)))
    print("KERNEL_OK")
</pallas_src>

<mosaic_0001>
module attributes {stable_mosaic.version = 11 : i64} {
  func.func @kernel(%arg0: i32, %arg1: memref<16x16xf32, #tpu.memory_space<vmem>>, %arg2: memref<16x16xf32, #tpu.memory_space<vmem>>, %arg3: memref<8x16x16xf32, #tpu.memory_space<vmem>>, %arg4: memref<8x16x16xf32, #tpu.memory_space<vmem>>) attributes {dimension_semantics = [#tpu.dimension_semantics<parallel>], iteration_bounds = array<i64: 1>, scalar_prefetch = 0 : i64, scratch_operands = 0 : i64, tpu.core_type = #tpu.core_type<tc>, window_params = [{pipeline_mode = #tpu.pipeline_mode<synchronous>, transform_indices = @transform_0, window_bounds = array<i64: 16, 16>}, {pipeline_mode = #tpu.pipeline_mode<synchronous>, transform_indices = @transform_1, window_bounds = array<i64: 16, 16>}, {transform_indices = @transform_2, window_bounds = array<i64: 8, 16, 16>}, {transform_indices = @transform_3, window_bounds = array<i64: 8, 16, 16>}]} {
    %c0 = arith.constant 0 : index
    %c0_0 = arith.constant 0 : index
    %c0_1 = arith.constant 0 : index
    %0 = vector.load %arg3[%c0, %c0_0, %c0_1] : memref<8x16x16xf32, #tpu.memory_space<vmem>>, vector<8x16x16xf32>
    %c0_2 = arith.constant 0 : index
    %c0_3 = arith.constant 0 : index
    %1 = vector.load %arg1[%c0_2, %c0_3] : memref<16x16xf32, #tpu.memory_space<vmem>>, vector<16x16xf32>
    %2 = vector.shape_cast %1 : vector<16x16xf32> to vector<1x16x16xf32>
    %3 = vector.broadcast %2 : vector<1x16x16xf32> to vector<8x16x16xf32>
    %c0_4 = arith.constant 0 : index
    %c0_5 = arith.constant 0 : index
    %4 = vector.load %arg2[%c0_4, %c0_5] : memref<16x16xf32, #tpu.memory_space<vmem>>, vector<16x16xf32>
    %5 = vector.shape_cast %4 : vector<16x16xf32> to vector<1x16x16xf32>
    %6 = vector.broadcast %5 : vector<1x16x16xf32> to vector<8x16x16xf32>
    "tpu.trace_start"() <{level = 10 : i32, message = "phw,pjw->phj"}> : () -> ()
    %cst = arith.constant dense<0.000000e+00> : vector<8x16x16xf32>
    %7 = tpu.matmul %0, %6, %cst {dimension_numbers = #tpu.dot_dimension_numbers<[2], [2], [1], [1], [0, 0, 0, 1, 1, 1], [0], [0]>} : vector<8x16x16xf32>, vector<8x16x16xf32>, vector<8x16x16xf32> -> vector<8x16x16xf32>
    "tpu.trace_stop"() : () -> ()
    "tpu.trace_start"() <{level = 10 : i32, message = "pih,phj->pij"}> : () -> ()
    %cst_6 = arith.constant dense<0.000000e+00> : vector<8x16x16xf32>
    %8 = tpu.matmul %3, %7, %cst_6 {dimension_numbers = #tpu.dot_dimension_numbers<[2], [1], [1], [2], [0, 0, 0, 1, 1, 2], [0], [0]>} : vector<8x16x16xf32>, vector<8x16x16xf32>, vector<8x16x16xf32> -> vector<8x16x16xf32>
    "tpu.trace_stop"() : () -> ()
    %9 = arith.subf %0, %8 : vector<8x16x16xf32>
    %10 = math.absf %9 : vector<8x16x16xf32>
    %cst_7 = arith.constant 2.550000e+02 : f32
    %11 = vector.broadcast %cst_7 : f32 to vector<8x16x16xf32>
    %12 = arith.mulf %10, %11 : vector<8x16x16xf32>
    %cst_8 = arith.constant 1.000000e+01 : f32
    %13 = vector.broadcast %cst_8 : f32 to vector<8x16x16xf32>
    %14 = arith.cmpf ogt, %12, %13 : vector<8x16x16xf32>
    %15 = arith.extui %14 : vector<8x16x16xi1> to vector<8x16x16xi32>
    %16 = arith.sitofp %15 : vector<8x16x16xi32> to vector<8x16x16xf32>
    %cst_9 = arith.constant 5.000000e-01 : f32
    %17 = vector.broadcast %cst_9 : f32 to vector<8x16x16xf32>
    %18 = arith.mulf %17, %9 : vector<8x16x16xf32>
    %19 = arith.addf %0, %18 : vector<8x16x16xf32>
    %cst_10 = arith.constant 0.000000e+00 : f32
    %cst_11 = arith.constant 1.000000e+00 : f32
    %20 = vector.broadcast %cst_10 : f32 to vector<8x16x16xf32>
    %21 = arith.maximumf %20, %19 : vector<8x16x16xf32>
    %22 = vector.broadcast %cst_11 : f32 to vector<8x16x16xf32>
    %23 = arith.minimumf %22, %21 : vector<8x16x16xf32>
    "tpu.trace_start"() <{level = 10 : i32, message = "phw,pjw->phj"}> : () -> ()
    %cst_12 = arith.constant dense<0.000000e+00> : vector<8x16x16xf32>
    %24 = tpu.matmul %16, %6, %cst_12 {dimension_numbers = #tpu.dot_dimension_numbers<[2], [2], [1], [1], [0, 0, 0, 1, 1, 1], [0], [0]>} : vector<8x16x16xf32>, vector<8x16x16xf32>, vector<8x16x16xf32> -> vector<8x16x16xf32>
    "tpu.trace_stop"() : () -> ()
    "tpu.trace_start"() <{level = 10 : i32, message = "pih,phj->pij"}> : () -> ()
    %cst_13 = arith.constant dense<0.000000e+00> : vector<8x16x16xf32>
    %25 = tpu.matmul %3, %24, %cst_13 {dimension_numbers = #tpu.dot_dimension_numbers<[2], [1], [1], [2], [0, 0, 0, 1, 1, 2], [0], [0]>} : vector<8x16x16xf32>, vector<8x16x16xf32>, vector<8x16x16xf32> -> vector<8x16x16xf32>
    "tpu.trace_stop"() : () -> ()
    %26 = arith.mulf %25, %23 : vector<8x16x16xf32>
    %cst_14 = arith.constant 1.000000e+00 : f32
    %27 = vector.broadcast %cst_14 : f32 to vector<8x16x16xf32>
    %28 = arith.subf %27, %25 : vector<8x16x16xf32>
    %29 = arith.mulf %28, %0 : vector<8x16x16xf32>
    %30 = arith.addf %26, %29 : vector<8x16x16xf32>
    %c0_15 = arith.constant 0 : index
    %c0_16 = arith.constant 0 : index
    %c0_17 = arith.constant 0 : index
    %31 = vector.load %arg4[%c0_15, %c0_16, %c0_17] : memref<8x16x16xf32, #tpu.memory_space<vmem>>, vector<8x16x16xf32>
    tpu.vector_store %arg4[%c0_15, %c0_16, %c0_17], %30 {strides = array<i32>} : memref<8x16x16xf32, #tpu.memory_space<vmem>>, vector<8x16x16xf32>,
    return
  }
  func.func @transform_0(%arg0: i32) -> (i32, i32) {
    %c0_i32 = arith.constant 0 : i32
    %c0_i32_0 = arith.constant 0 : i32
    %c0_i32_1 = arith.constant 0 : i32
    return %c0_i32, %c0_i32_0 : i32, i32
  }
  func.func @transform_1(%arg0: i32) -> (i32, i32) {
    %c0_i32 = arith.constant 0 : i32
    %c0_i32_0 = arith.constant 0 : i32
    %c0_i32_1 = arith.constant 0 : i32
    return %c0_i32, %c0_i32_0 : i32, i32
  }
  func.func @transform_2(%arg0: i32) -> (i32, i32, i32) {
    %c0_i32 = arith.constant 0 : i32
    %c0_i32_0 = arith.constant 0 : i32
    %c0_i32_1 = arith.constant 0 : i32
    return %arg0, %c0_i32, %c0_i32_0 : i32, i32, i32
  }
  func.func @transform_3(%arg0: i32) -> (i32, i32, i32) {
    %c0_i32 = arith.constant 0 : i32
    %c0_i32_0 = arith.constant 0 : i32
    %c0_i32_1 = arith.constant 0 : i32
    return %arg0, %c0_i32, %c0_i32_0 : i32, i32, i32
  }
}

</mosaic_0001>

<llo_original>
// kernel: tpu_custom_call.1
$region0: #{tpu_custom_call.1}
  #allocation0 [shape = 'u32[]', space=smem, size = 0x4, offset = 0x4, fixed_abs, tag = 'smem constant byte address 0x4 - core index']
  #allocation1 [shape = 'u32[144,128]{1,0:T(1,128)}', space=vmem, size = 0x12000, scoped, tag = 'internal scratch']
  %s0 = inlined_call_operand.hbm [shape: f32[16,16], index: 0, kind: input, shape index: {}]
  %s1 = inlined_call_operand.hbm [shape: f32[16,16], index: 1, kind: input, shape index: {}]
  %s2 = inlined_call_operand.hbm [shape: f32[8,16,16], index: 2, kind: input, shape index: {}]
  %s3 = inlined_call_operand.hbm [shape: f32[8,16,16], index: 3, kind: output, shape index: {}]
  %s4 = sld [smem:[#allocation0]]
  $region34: #{tpu_custom_call.1} parent=0
    _
  %s6 = ssub.s32 1, %s4
  %s7 = scalar_select 0, %s6, %s4
  $region1: #{tpu_custom_call.1} parent=0
    #allocation2 [shape = 'u8[8192]{0}', space=vmem, size = 0x2000, scoped, tag = 'input window, operand 0, single buffered']
    #allocation3 [shape = 's32[1]{0}', space=sflag, size = 0x4, scoped, tag = 'scoped memory for tpu_custom_call.1']
    #allocation4 [shape = 's32[1]{0}', space=sflag, size = 0x4, scoped, tag = 'scoped memory for tpu_custom_call.1']
    #allocation5 [shape = 'u8[8192]{0}', space=vmem, size = 0x2000, scoped, tag = 'input window, operand 1, single buffered']
    #allocation6 [shape = 's32[1]{0}', space=sflag, size = 0x4, scoped, tag = 'scoped memory for tpu_custom_call.1']
    #allocation7 [shape = 'u8[65536]{0}', space=vmem, size = 0x10000, scoped, tag = 'input window, operand 2, single buffered']
    #allocation8 [shape = 'u8[65536]{0}', space=vmem, size = 0x10000, scoped, tag = 'output window, operand 0, single buffered']
    %8 = vsyncpa [#allocation3], 0
    %9 = vsyncpa [#allocation6], 0
    %10 = vsyncpa [#allocation4], 0
    // Predicated region
    $region2: #{tpu_custom_call.1} parent=1 // pred_check
      _
    $region3: #{tpu_custom_call.1} parent=1 // pred_check_branch
      %12 = sbr.rel (0) target = $region5
    $region4: #{tpu_custom_call.1} parent=1 // pred_region
      %s14 = ssub.s32 256, 256
      %15 = vsyncadd [#allocation3], %s14
      %s16 = sshll.u32 [#allocation2], 4
      %s17 = int_to_ptr.vmem [resolvable:$true] %s16
      %22 = dma.hbm_to_vmem [thread:$0]  %s0, 256, %s17, [#allocation3], 128, 128, 8
    $region5: #{tpu_custom_call.1} parent=1 // pred_fallthru
      _
    // Predicated region
    $region6: #{tpu_custom_call.1} parent=1 // pred_check
      _
    $region7: #{tpu_custom_call.1} parent=1 // pred_check_branch
      %24 = sbr.rel (0) target = $region9
    $region8: #{tpu_custom_call.1} parent=1 // pred_region
      %s26 = ssub.s32 256, 256
      %27 = vsyncadd [#allocation6], %s26
      %s28 = sshll.u32 [#allocation5], 4
      %s29 = int_to_ptr.vmem [resolvable:$true] %s28
      %34 = dma.hbm_to_vmem [thread:$0]  %s1, 256, %s29, [#allocation6], 128, 128, 8
    $region9: #{tpu_custom_call.1} parent=1 // pred_fallthru
      _
    // Predicated region
    $region10: #{tpu_custom_call.1} parent=1 // pred_check
      _
    $region11: #{tpu_custom_call.1} parent=1 // pred_check_branch
      %36 = sbr.rel (0) target = $region13
    $region12: #{tpu_custom_call.1} parent=1 // pred_region
      %s38 = ssub.s32 2048, 2048
      %39 = vsyncadd [#allocation6], %s38
      %s40 = sshll.u32 [#allocation7], 4
      %s41 = int_to_ptr.vmem [resolvable:$true] %s40
      %46 = dma.hbm_to_vmem [thread:$0]  %s2, 2048, %s41, [#allocation6], 128, 128, 8
    $region13: #{tpu_custom_call.1} parent=1 // pred_fallthru
      _
    // Predicated region
    $region14: #{tpu_custom_call.1} parent=1 // pred_check
      _
    $region15: #{tpu_custom_call.1} parent=1 // pred_check_branch
      %48 = sbr.rel (0) target = $region17
    $region16: #{tpu_custom_call.1} parent=1 // pred_region
      %49 = dma.done [#allocation3], 256
    $region17: #{tpu_custom_call.1} parent=1 // pred_fallthru
      _
    // Predicated region
    $region18: #{tpu_custom_call.1} parent=1 // pred_check
      _
    $region19: #{tpu_custom_call.1} parent=1 // pred_check_branch
      %51 = sbr.rel (0) target = $region21
    $region20: #{tpu_custom_call.1} parent=1 // pred_region
      %52 = dma.done [#allocation6], 256
    $region21: #{tpu_custom_call.1} parent=1 // pred_fallthru
      _
    // Predicated region
    $region22: #{tpu_custom_call.1} parent=1 // pred_check
      _
    $region23: #{tpu_custom_call.1} parent=1 // pred_check_branch
      %54 = sbr.rel (0) target = $region25
    $region24: #{tpu_custom_call.1} parent=1 // pred_region
      %55 = dma.done [#allocation6], 2048
    $region25: #{tpu_custom_call.1} parent=1 // pred_fallthru
      _
    %v56 = vld [vmem:[#allocation7] sm:$0xff]
    %v57 = vld [vmem:[#allocation7 + $0x8] sm:$0xff]
    %v58 = vld [vmem:[#allocation7 + $0x10] sm:$0xff]
    %v59 = vld [vmem:[#allocation7 + $0x18] sm:$0xff]
    %v60 = vld [vmem:[#allocation7 + $0x20] sm:$0xff]
    %v61 = vld [vmem:[#allocation7 + $0x28] sm:$0xff]
    %v62 = vld [vmem:[#allocation7 + $0x30] sm:$0xff]
    %v63 = vld [vmem:[#allocation7 + $0x38] sm:$0xff]
    %v64 = vld [vmem:[#allocation7 + $0x40] sm:$0xff]
    %v65 = vld [vmem:[#allocation7 + $0x48] sm:$0xff]
    %v66 = vld [vmem:[#allocation7 + $0x50] sm:$0xff]
    %v67 = vld [vmem:[#allocation7 + $0x58] sm:$0xff]
    %v68 = vld [vmem:[#allocation7 + $0x60] sm:$0xff]
    %v69 = vld [vmem:[#allocation7 + $0x68] sm:$0xff]
    %v70 = vld [vmem:[#allocation7 + $0x70] sm:$0xff]
    %v71 = vld [vmem:[#allocation7 + $0x78] sm:$0xff]
    %v72 = vld [vmem:[#allocation2] sm:$0xff]
    %v73 = vld [vmem:[#allocation2 + $0x8] sm:$0xff]
    %v74 = vld [vmem:[#allocation5] sm:$0xff]
    %v75 = vld [vmem:[#allocation5 + $0x8] sm:$0xff]
    %vm76 = vcmask 130048
    %v78 = vsel %vm76, %v56, 0
    %v81 = vsel %vm76, %v57, 0
    %v84 = vsel %vm76, %v74, 0
    %v87 = vsel %vm76, %v75, 0
    %89 = vmatprep.subr.mxu0 0.0
    %90 = vmatpush1.xpose.msra.mxu0 0.0
    %91 = vmatprep.subr.mxu0 0.0
    %92 = vmatpush1.xpose.msra.mxu0 0.0
    %93 = vmatprep.subr.mxu0 0.0
    %94 = vmatpush1.xpose.msra.mxu0 0.0
    %95 = vmatprep.subr.mxu0 0.0
    %96 = vmatpush1.xpose.msra.mxu0 0.0
    %97 = vmatprep.subr.mxu0 0.0
    %98 = vmatpush1.xpose.msra.mxu0 0.0
    %99 = vmatprep.subr.mxu0 0.0
    %100 = vmatpush1.xpose.msra.mxu0 0.0
    %101 = vmatprep.subr.mxu0 0.0
    %102 = vmatpush1.xpose.msra.mxu0 0.0
    %103 = vmatprep.subr.mxu0 0.0
    %104 = vmatpush1.xpose.msra.mxu0 0.0
    %105 = vmatprep.subr.mxu0 0.0
    %106 = vmatpush1.xpose.msra.mxu0 0.0
    %107 = vmatprep.subr.mxu0 0.0
    %108 = vmatpush1.xpose.msra.mxu0 0.0
    %109 = vmatprep.subr.mxu0 0.0
    %110 = vmatpush1.xpose.msra.mxu0 0.0
    %111 = vmatprep.subr.mxu0 0.0
    %112 = vmatpush1.xpose.msra.mxu0 0.0
    %113 = vmatprep.subr.mxu0 0.0
    %114 = vmatpush1.xpose.msra.mxu0 0.0
    %115 = vmatprep.subr.mxu0 0.0
    %116 = vmatpush1.xpose.msra.mxu0 0.0
    %117 = vmatprep.subr.mxu0 0.0
    %118 = vmatpush1.xpose.msra.mxu0 %v87
    %119 = vmatprep.subr.mxu0 0.0
    %120 = vmatpush1.xpose.msra.mxu0 %v84
    %121 = vmatprep.subr.mxu0 0.0
    %122 = vmatpush2.xpose.msra.mxu0 0.0
    %123 = vmatprep.subr.mxu0 0.0
    %124 = vmatpush2.xpose.msra.mxu0 0.0
    %125 = vmatprep.subr.mxu0 0.0
    %126 = vmatpush2.xpose.msra.mxu0 0.0
    %127 = vmatprep.subr.mxu0 0.0
    %128 = vmatpush2.xpose.msra.mxu0 0.0
    %129 = vmatprep.subr.mxu0 0.0
    %130 = vmatpush2.xpose.msra.mxu0 0.0
    %131 = vmatprep.subr.mxu0 0.0
    %132 = vmatpush2.xpose.msra.mxu0 0.0
    %133 = vmatprep.subr.mxu0 0.0
    %134 = vmatpush2.xpose.msra.mxu0 0.0
    %135 = vmatprep.subr.mxu0 0.0
    %136 = vmatpush2.xpose.msra.mxu0 0.0
    %137 = vmatprep.subr.mxu0 0.0
    %138 = vmatpush2.xpose.msra.mxu0 0.0
    %139 = vmatprep.subr.mxu0 0.0
    %140 = vmatpush2.xpose.msra.mxu0 0.0
    %141 = vmatprep.subr.mxu0 0.0
    %142 = vmatpush2.xpose.msra.mxu0 0.0
    %143 = vmatprep.subr.mxu0 0.0
    %144 = vmatpush2.xpose.msra.mxu0 0.0
    %145 = vmatprep.subr.mxu0 0.0
    %146 = vmatpush2.xpose.msra.mxu0 0.0
    %147 = vmatprep.subr.mxu0 0.0
    %148 = vmatpush2.xpose.msra.mxu0 0.0
    %149 = vmatprep.subr.mxu0 0.0
    %150 = vmatpush2.xpose.msra.mxu0 0.0
    %151 = vmatprep.subr.mxu0 0.0
    %152 = vmatpush2.xpose.msra.mxu0 0.0
    %153 = vmatprep.mubr.f32.mxu0 0.0
    %154 = vmatmul.mubr.f32.gmra.mxu0 %v78
    %v155 = vpop.f32.mrf.mxu0
    %v156 = vadd.f32 0.0, %v155
    %v157 = vpop.f32.mrf.mxu0
    %158 = vmatprep.mubr.f32.mxu0 0.0
    %159 = vmatmul.mubr.f32.gmra.mxu0 %v81
    %v160 = vpop.f32.mrf.mxu0
    %v161 = vadd.f32 0.0, %v160
    %v162 = vpop.f32.mrf.mxu0
    %163 = vdwg.mxu0
    %v165 = vsel %vm76, %v58, 0
    %v168 = vsel %vm76, %v59, 0
    %170 = vmatprep.subr.mxu0 0.0
    %171 = vmatpush1.xpose.msra.mxu0 0.0
    %172 = vmatprep.subr.mxu0 0.0
    %173 = vmatpush1.xpose.msra.mxu0 0.0
    %174 = vmatprep.subr.mxu0 0.0
    %175 = vmatpush1.xpose.msra.mxu0 0.0
    %176 = vmatprep.subr.mxu0 0.0
    %177 = vmatpush1.xpose.msra.mxu0 0.0
    %178 = vmatprep.subr.mxu0 0.0
    %179 = vmatpush1.xpose.msra.mxu0 0.0
    %180 = vmatprep.subr.mxu0 0.0
    %181 = vmatpush1.xpose.msra.mxu0 0.0
    %182 = vmatprep.subr.mxu0 0.0
    %183 = vmatpush1.xpose.msra.mxu0 0.0
    %184 = vmatprep.subr.mxu0 0.0
    %185 = vmatpush1.xpose.msra.mxu0 0.0
    %186 = vmatprep.subr.mxu0 0.0
    %187 = vmatpush1.xpose.msra.mxu0 0.0
    %188 = vmatprep.subr.mxu0 0.0
    %189 = vmatpush1.xpose.msra.mxu0 0.0
    %190 = vmatprep.subr.mxu0 0.0
    %191 = vmatpush1.xpose.msra.mxu0 0.0
    %192 = vmatprep.subr.mxu0 0.0
    %193 = vmatpush1.xpose.msra.mxu0 0.0
    %194 = vmatprep.subr.mxu0 0.0
    %195 = vmatpush1.xpose.msra.mxu0 0.0
    %196 = vmatprep.subr.mxu0 0.0
    %197 = vmatpush1.xpose.msra.mxu0 0.0
    %198 = vmatprep.subr.mxu0 0.0
    %199 = vmatpush1.xpose.msra.mxu0 %v87
    %200 = vmatprep.subr.mxu0 0.0
    %201 = vmatpush1.xpose.msra.mxu0 %v84
    %202 = vmatprep.subr.mxu0 0.0
    %203 = vmatpush2.xpose.msra.mxu0 0.0
    %204 = vmatprep.subr.mxu0 0.0
    %205 = vmatpush2.xpose.msra.mxu0 0.0
    %206 = vmatprep.subr.mxu0 0.0
    %207 = vmatpush2.xpose.msra.mxu0 0.0
    %208 = vmatprep.subr.mxu0 0.0
    %209 = vmatpush2.xpose.msra.mxu0 0.0
    %210 = vmatprep.subr.mxu0 0.0
    %211 = vmatpush2.xpose.msra.mxu0 0.0
    %212 = vmatprep.subr.mxu0 0.0
    %213 = vmatpush2.xpose.msra.mxu0 0.0
    %214 = vmatprep.subr.mxu0 0.0
    %215 = vmatpush2.xpose.msra.mxu0 0.0
    %216 = vmatprep.subr.mxu0 0.0
    %217 = vmatpush2.xpose.msra.mxu0 0.0
    %218 = vmatprep.subr.mxu0 0.0
    %219 = vmatpush2.xpose.msra.mxu0 0.0
    %220 = vmatprep.subr.mxu0 0.0
    %221 = vmatpush2.xpose.msra.mxu0 0.0
    %222 = vmatprep.subr.mxu0 0.0
    %223 = vmatpush2.xpose.msra.mxu0 0.0
    %224 = vmatprep.subr.mxu0 0.0
    %225 = vmatpush2.xpose.msra.mxu0 0.0
    %226 = vmatprep.subr.mxu0 0.0
    %227 = vmatpush2.xpose.msra.mxu0 0.0
    %228 = vmatprep.subr.mxu0 0.0
    %229 = vmatpush2.xpose.msra.mxu0 0.0
    %230 = vmatprep.subr.mxu0 0.0
    %231 = vmatpush2.xpose.msra.mxu0 0.0
    %232 = vmatprep.subr.mxu0 0.0
    %233 = vmatpush2.xpose.msra.mxu0 0.0
    %234 = vmatprep.mubr.f32.mxu0 0.0
    %235 = vmatmul.mubr.f32.gmra.mxu0 %v165
    %v236 = vpop.f32.mrf.mxu0
    %v237 = vadd.f32 0.0, %v236
    %v238 = vpop.f32.mrf.mxu0
    %239 = vmatprep.mubr.f32.mxu0 0.0
    %240 = vmatmul.mubr.f32.gmra.mxu0 %v168
    %v241 = vpop.f32.mrf.mxu0
    %v242 = vadd.f32 0.0, %v241
    %v243 = vpop.f32.mrf.mxu0
    %244 = vdwg.mxu0
    %v246 = vsel %vm76, %v60, 0
    %v249 = vsel %vm76, %v61, 0
    %251 = vmatprep.subr.mxu0 0.0
    %252 = vmatpush1.xpose.msra.mxu0 0.0
    %253 = vmatprep.subr.mxu0 0.0
    %254 = vmatpush1.xpose.msra.mxu0 0.0
    %255 = vmatprep.subr.mxu0 0.0
    %256 = vmatpush1.xpose.msra.mxu0 0.0
    %257 = vmatprep.subr.mxu0 0.0
    %258 = vmatpush1.xpose.msra.mxu0 0.0
    %259 = vmatprep.subr.mxu0 0.0
    %260 = vmatpush1.xpose.msra.mxu0 0.0
    %261 = vmatprep.subr.mxu0 0.0
    %262 = vmatpush1.xpose.msra.mxu0 0.0
    %263 = vmatprep.subr.mxu0 0.0
    %264 = vmatpush1.xpose.msra.mxu0 0.0
    %265 = vmatprep.subr.mxu0 0.0
    %266 = vmatpush1.xpose.msra.mxu0 0.0
    %267 = vmatprep.subr.mxu0 0.0
    %268 = vmatpush1.xpose.msra.mxu0 0.0
    %269 = vmatprep.subr.mxu0 0.0
    %270 = vmatpush1.xpose.msra.mxu0 0.0
    %271 = vmatprep.subr.mxu0 0.0
    %272 = vmatpush1.xpose.msra.mxu0 0.0
    %273 = vmatprep.subr.mxu0 0.0
    %274 = vmatpush1.xpose.msra.mxu0 0.0
    %275 = vmatprep.subr.mxu0 0.0
    %276 = vmatpush1.xpose.msra.mxu0 0.0
    %277 = vmatprep.subr.mxu0 0.0
    %278 = vmatpush1.xpose.msra.mxu0 0.0
    %279 = vmatprep.subr.mxu0 0.0
    %280 = vmatpush1.xpose.msra.mxu0 %v87
    %281 = vmatprep.subr.mxu0 0.0
    %282 = vmatpush1.xpose.msra.mxu0 %v84
    %283 = vmatprep.subr.mxu0 0.0
    %284 = vmatpush2.xpose.msra.mxu0 0.0
    %285 = vmatprep.subr.mxu0 0.0
    %286 = vmatpush2.xpose.msra.mxu0 0.0
    %287 = vmatprep.subr.mxu0 0.0
    %288 = vmatpush2.xpose.msra.mxu0 0.0
    %289 = vmatprep.subr.mxu0 0.0
    %290 = vmatpush2.xpose.msra.mxu0 0.0
    %291 = vmatprep.subr.mxu0 0.0
    %292 = vmatpush2.xpose.msra.mxu0 0.0
    %293 = vmatprep.subr.mxu0 0.0
    %294 = vmatpush2.xpose.msra.mxu0 0.0
    %295 = vmatprep.subr.mxu0 0.0
    %296 = vmatpush2.xpose.msra.mxu0 0.0
    %297 = vmatprep.subr.mxu0 0.0
    %298 = vmatpush2.xpose.msra.mxu0 0.0
    %299 = vmatprep.subr.mxu0 0.0
    %300 = vmatpush2.xpose.msra.mxu0 0.0
    %301 = vmatprep.subr.mxu0 0.0
    %302 = vmatpush2.xpose.msra.mxu0 0.0
    %303 = vmatprep.subr.mxu0 0.0
    %304 = vmatpush2.xpose.msra.mxu0 0.0
    %305 = vmatprep.subr.mxu0 0.0
    %306 = vmatpush2.xpose.msra.mxu0 0.0
    %307 = vmatprep.subr.mxu0 0.0
    %308 = vmatpush2.xpose.msra.mxu0 0.0
    %309 = vmatprep.subr.mxu0 0.0
    %310 = vmatpush2.xpose.msra.mxu0 0.0
    %311 = vmatprep.subr.mxu0 0.0
    %312 = vmatpush2.xpose.msra.mxu0 0.0
    %313 = vmatprep.subr.mxu0 0.0
    %314 = vmatpush2.xpose.msra.mxu0 0.0
    %315 = vmatprep.mubr.f32.mxu0 0.0
    %316 = vmatmul.mubr.f32.gmra.mxu0 %v246
    %v317 = vpop.f32.mrf.mxu0
    %v318 = vadd.f32 0.0, %v317
    %v319 = vpop.f32.mrf.mxu0
    %320 = vmatprep.mubr.f32.mxu0 0.0
    %321 = vmatmul.mubr.f32.gmra.mxu0 %v249
    %v322 = vpop.f32.mrf.mxu0
    %v323 = vadd.f32 0.0, %v322
    %v324 = vpop.f32.mrf.mxu0
    %325 = vdwg.mxu0
    %v327 = vsel %vm76, %v62, 0
    %v330 = vsel %vm76, %v63, 0
    %332 = vmatprep.subr.mxu0 0.0
    %333 = vmatpush1.xpose.msra.mxu0 0.0
    %334 = vmatprep.subr.mxu0 0.0
    %335 = vmatpush1.xpose.msra.mxu0 0.0
    %336 = vmatprep.subr.mxu0 0.0
    %337 = vmatpush1.xpose.msra.mxu0 0.0
    %338 = vmatprep.subr.mxu0 0.0
    %339 = vmatpush1.xpose.msra.mxu0 0.0
    %340 = vmatprep.subr.mxu0 0.0
    %341 = vmatpush1.xpose.msra.mxu0 0.0
    %342 = vmatprep.subr.mxu0 0.0
    %343 = vmatpush1.xpose.msra.mxu0 0.0
    %344 = vmatprep.subr.mxu0 0.0
    %345 = vmatpush1.xpose.msra.mxu0 0.0
    %346 = vmatprep.subr.mxu0 0.0
    %347 = vmatpush1.xpose.msra.mxu0 0.0
    %348 = vmatprep.subr.mxu0 0.0
    %349 = vmatpush1.xpose.msra.mxu0 0.0
    %350 = vmatprep.subr.mxu0 0.0
    %351 = vmatpush1.xpose.msra.mxu0 0.0
    %352 = vmatprep.subr.mxu0 0.0
    %353 = vmatpush1.xpose.msra.mxu0 0.0
    %354 = vmatprep.subr.mxu0 0.0
    %355 = vmatpush1.xpose.msra.mxu0 0.0
    %356 = vmatprep.subr.mxu0 0.0
    %357 = vmatpush1.xpose.msra.mxu0 0.0
    %358 = vmatprep.subr.mxu0 0.0
    %359 = vmatpush1.xpose.msra.mxu0 0.0
    %360 = vmatprep.subr.mxu0 0.0
    %361 = vmatpush1.xpose.msra.mxu0 %v87
    %362 = vmatprep.subr.mxu0 0.0
    %363 = vmatpush1.xpose.msra.mxu0 %v84
    %364 = vmatprep.subr.mxu0 0.0
    %365 = vmatpush2.xpose.msra.mxu0 0.0
    %366 = vmatprep.subr.mxu0 0.0
    %367 = vmatpush2.xpose.msra.mxu0 0.0
    %368 = vmatprep.subr.mxu0 0.0
    %369 = vmatpush2.xpose.msra.mxu0 0.0
    %370 = vmatprep.subr.mxu0 0.0
    %371 = vmatpush2.xpose.msra.mxu0 0.0
    %372 = vmatprep.subr.mxu0 0.0
    %373 = vmatpush2.xpose.msra.mxu0 0.0
    %374 = vmatprep.subr.mxu0 0.0
    %375 = vmatpush2.xpose.msra.mxu0 0.0
    %376 = vmatprep.subr.mxu0 0.0
    %377 = vmatpush2.xpose.msra.mxu0 0.0
    %378 = vmatprep.subr.mxu0 0.0
    %379 = vmatpush2.xpose.msra.mxu0 0.0
    %380 = vmatprep.subr.mxu0 0.0
    %381 = vmatpush2.xpose.msra.mxu0 0.0
    %382 = vmatprep.subr.mxu0 0.0
    %383 = vmatpush2.xpose.msra.mxu0 0.0
    %384 = vmatprep.subr.mxu0 0.0
    %385 = vmatpush2.xpose.msra.mxu0 0.0
    %386 = vmatprep.subr.mxu0 0.0
    %387 = vmatpush2.xpose.msra.mxu0 0.0
    %388 = vmatprep.subr.mxu0 0.0
    %389 = vmatpush2.xpose.msra.mxu0 0.0
    %390 = vmatprep.subr.mxu0 0.0
    %391 = vmatpush2.xpose.msra.mxu0 0.0
    %392 = vmatprep.subr.mxu0 0.0
    %393 = vmatpush2.xpose.msra.mxu0 0.0
    %394 = vmatprep.subr.mxu0 0.0
    %395 = vmatpush2.xpose.msra.mxu0 0.0
    %396 = vmatprep.mubr.f32.mxu0 0.0
    %397 = vmatmul.mubr.f32.gmra.mxu0 %v327
    %v398 = vpop.f32.mrf.mxu0
    %v399 = vadd.f32 0.0, %v398
    %v400 = vpop.f32.mrf.mxu0
    %401 = vmatprep.mubr.f32.mxu0 0.0
    %402 = vmatmul.mubr.f32.gmra.mxu0 %v330
    %v403 = vpop.f32.mrf.mxu0
    %v404 = vadd.f32 0.0, %v403
    %v405 = vpop.f32.mrf.mxu0
    %406 = vdwg.mxu0
    %v408 = vsel %vm76, %v64, 0
    %v411 = vsel %vm76, %v65, 0
    %413 = vmatprep.subr.mxu0 0.0
    %414 = vmatpush1.xpose.msra.mxu0 0.0
    %415 = vmatprep.subr.mxu0 0.0
    %416 = vmatpush1.xpose.msra.mxu0 0.0
    %417 = vmatprep.subr.mxu0 0.0
    %418 = vmatpush1.xpose.msra.mxu0 0.0
    %419 = vmatprep.subr.mxu0 0.0
    %420 = vmatpush1.xpose.msra.mxu0 0.0
    %421 = vmatprep.subr.mxu0 0.0
    %422 = vmatpush1.xpose.msra.mxu0 0.0
    %423 = vmatprep.subr.mxu0 0.0
    %424 = vmatpush1.xpose.msra.mxu0 0.0
    %425 = vmatprep.subr.mxu0 0.0
    %426 = vmatpush1.xpose.msra.mxu0 0.0
    %427 = vmatprep.subr.mxu0 0.0
    %428 = vmatpush1.xpose.msra.mxu0 0.0
    %429 = vmatprep.subr.mxu0 0.0
    %430 = vmatpush1.xpose.msra.mxu0 0.0
    %431 = vmatprep.subr.mxu0 0.0
    %432 = vmatpush1.xpose.msra.mxu0 0.0
    %433 = vmatprep.subr.mxu0 0.0
    %434 = vmatpush1.xpose.msra.mxu0 0.0
    %435 = vmatprep.subr.mxu0 0.0
    %436 = vmatpush1.xpose.msra.mxu0 0.0
    %437 = vmatprep.subr.mxu0 0.0
    %438 = vmatpush1.xpose.msra.mxu0 0.0
    %439 = vmatprep.subr.mxu0 0.0
    %440 = vmatpush1.xpose.msra.mxu0 0.0
    %441 = vmatprep.subr.mxu0 0.0
    %442 = vmatpush1.xpose.msra.mxu0 %v87
    %443 = vmatprep.subr.mxu0 0.0
    %444 = vmatpush1.xpose.msra.mxu0 %v84
    %445 = vmatprep.subr.mxu0 0.0
    %446 = vmatpush2.xpose.msra.mxu0 0.0
    %447 = vmatprep.subr.mxu0 0.0
    %448 = vmatpush2.xpose.msra.mxu0 0.0
    %449 = vmatprep.subr.mxu0 0.0
    %450 = vmatpush2.xpose.msra.mxu0 0.0
    %451 = vmatprep.subr.mxu0 0.0
    %452 = vmatpush2.xpose.msra.mxu0 0.0
    %453 = vmatprep.subr.mxu0 0.0
    %454 = vmatpush2.xpose.msra.mxu0 0.0
    %455 = vmatprep.subr.mxu0 0.0
    %456 = vmatpush2.xpose.msra.mxu0 0.0
    %457 = vmatprep.subr.mxu0 0.0
    %458 = vmatpush2.xpose.msra.mxu0 0.0
    %459 = vmatprep.subr.mxu0 0.0
    %460 = vmatpush2.xpose.msra.mxu0 0.0
    %461 = vmatprep.subr.mxu0 0.0
    %462 = vmatpush2.xpose.msra.mxu0 0.0
    %463 = vmatprep.subr.mxu0 0.0
    %464 = vmatpush2.xpose.msra.mxu0 0.0
    %465 = vmatprep.subr.mxu0 0.0
    %466 = vmatpush2.xpose.msra.mxu0 0.0
    %467 = vmatprep.subr.mxu0 0.0
    %468 = vmatpush2.xpose.msra.mxu0 0.0
    %469 = vmatprep.subr.mxu0 0.0
    %470 = vmatpush2.xpose.msra.mxu0 0.0
    %471 = vmatprep.subr.mxu0 0.0
    %472 = vmatpush2.xpose.msra.mxu0 0.0
    %473 = vmatprep.subr.mxu0 0.0
    %474 = vmatpush2.xpose.msra.mxu0 0.0
    %475 = vmatprep.subr.mxu0 0.0
    %476 = vmatpush2.xpose.msra.mxu0 0.0
    %477 = vmatprep.mubr.f32.mxu0 0.0
    %478 = vmatmul.mubr.f32.gmra.mxu0 %v408
    %v479 = vpop.f32.mrf.mxu0
    %v480 = vadd.f32 0.0, %v479
    %v481 = vpop.f32.mrf.mxu0
    %482 = vmatprep.mubr.f32.mxu0 0.0
    %483 = vmatmul.mubr.f32.gmra.mxu0 %v411
    %v484 = vpop.f32.mrf.mxu0
    %v485 = vadd.f32 0.0, %v484
    %v486 = vpop.f32.mrf.mxu0
    %487 = vdwg.mxu0
    %v489 = vsel %vm76, %v66, 0
    %v492 = vsel %vm76, %v67, 0
    %494 = vmatprep.subr.mxu0 0.0
    %495 = vmatpush1.xpose.msra.mxu0 0.0
    %496 = vmatprep.subr.mxu0 0.0
    %497 = vmatpush1.xpose.msra.mxu0 0.0
    %498 = vmatprep.subr.mxu0 0.0
    %499 = vmatpush1.xpose.msra.mxu0 0.0
    %500 = vmatprep.subr.mxu0 0.0
    %501 = vmatpush1.xpose.msra.mxu0 0.0
    %502 = vmatprep.subr.mxu0 0.0
    %503 = vmatpush1.xpose.msra.mxu0 0.0
    %504 = vmatprep.subr.mxu0 0.0
    %505 = vmatpush1.xpose.msra.mxu0 0.0
    %506 = vmatprep.subr.mxu0 0.0
    %507 = vmatpush1.xpose.msra.mxu0 0.0
    %508 = vmatprep.subr.mxu0 0.0
    %509 = vmatpush1.xpose.msra.mxu0 0.0
    %510 = vmatprep.subr.mxu0 0.0
    %511 = vmatpush1.xpose.msra.mxu0 0.0
    %512 = vmatprep.subr.mxu0 0.0
    %513 = vmatpush1.xpose.msra.mxu0 0.0
    %514 = vmatprep.subr.mxu0 0.0
    %515 = vmatpush1.xpose.msra.mxu0 0.0
    %516 = vmatprep.subr.mxu0 0.0
    %517 = vmatpush1.xpose.msra.mxu0 0.0
    %518 = vmatprep.subr.mxu0 0.0
    %519 = vmatpush1.xpose.msra.mxu0 0.0
    %520 = vmatprep.subr.mxu0 0.0
    %521 = vmatpush1.xpose.msra.mxu0 0.0
    %522 = vmatprep.subr.mxu0 0.0
    %523 = vmatpush1.xpose.msra.mxu0 %v87
    %524 = vmatprep.subr.mxu0 0.0
    %525 = vmatpush1.xpose.msra.mxu0 %v84
    %526 = vmatprep.subr.mxu0 0.0
    %527 = vmatpush2.xpose.msra.mxu0 0.0
    %528 = vmatprep.subr.mxu0 0.0
    %529 = vmatpush2.xpose.msra.mxu0 0.0
    %530 = vmatprep.subr.mxu0 0.0
    %531 = vmatpush2.xpose.msra.mxu0 0.0
    %532 = vmatprep.subr.mxu0 0.0
    %533 = vmatpush2.xpose.msra.mxu0 0.0
    %534 = vmatprep.subr.mxu0 0.0
    %535 = vmatpush2.xpose.msra.mxu0 0.0
    %536 = vmatprep.subr.mxu0 0.0
    %537 = vmatpush2.xpose.msra.mxu0 0.0
    %538 = vmatprep.subr.mxu0 0.0
    %539 = vmatpush2.xpose.msra.mxu0 0.0
    %540 = vmatprep.subr.mxu0 0.0
    %541 = vmatpush2.xpose.msra.mxu0 0.0
    %542 = vmatprep.subr.mxu0 0.0
    %543 = vmatpush2.xpose.msra.mxu0 0.0
    %544 = vmatprep.subr.mxu0 0.0
    %545 = vmatpush2.xpose.msra.mxu0 0.0
    %546 = vmatprep.subr.mxu0 0.0
    %547 = vmatpush2.xpose.msra.mxu0 0.0
    %548 = vmatprep.subr.mxu0 0.0
    %549 = vmatpush2.xpose.msra.mxu0 0.0
    %550 = vmatprep.subr.mxu0 0.0
    %551 = vmatpush2.xpose.msra.mxu0 0.0
    %552 = vmatprep.subr.mxu0 0.0
    %553 = vmatpush2.xpose.msra.mxu0 0.0
    %554 = vmatprep.subr.mxu0 0.0
    %555 = vmatpush2.xpose.msra.mxu0 0.0
    %556 = vmatprep.subr.mxu0 0.0
    %557 = vmatpush2.xpose.msra.mxu0 0.0
    %558 = vmatprep.mubr.f32.mxu0 0.0
    %559 = vmatmul.mubr.f32.gmra.mxu0 %v489
    %v560 = vpop.f32.mrf.mxu0
    %v561 = vadd.f32 0.0, %v560
    %v562 = vpop.f32.mrf.mxu0
    %563 = vmatprep.mubr.f32.mxu0 0.0
    %564 = vmatmul.mubr.f32.gmra.mxu0 %v492
    %v565 = vpop.f32.mrf.mxu0
    %v566 = vadd.f32 0.0, %v565
    %v567 = vpop.f32.mrf.mxu0
    %568 = vdwg.mxu0
    %v570 = vsel %vm76, %v68, 0
    %v573 = vsel %vm76, %v69, 0
    %575 = vmatprep.subr.mxu0 0.0
    %576 = vmatpush1.xpose.msra.mxu0 0.0
    %577 = vmatprep.subr.mxu0 0.0
    %578 = vmatpush1.xpose.msra.mxu0 0.0
    %579 = vmatprep.subr.mxu0 0.0
    %580 = vmatpush1.xpose.msra.mxu0 0.0
    %581 = vmatprep.subr.mxu0 0.0
    %582 = vmatpush1.xpose.msra.mxu0 0.0
    %583 = vmatprep.subr.mxu0 0.0
    %584 = vmatpush1.xpose.msra.mxu0 0.0
    %585 = vmatprep.subr.mxu0 0.0
    %586 = vmatpush1.xpose.msra.mxu0 0.0
    %587 = vmatprep.subr.mxu0 0.0
    %588 = vmatpush1.xpose.msra.mxu0 0.0
    %589 = vmatprep.subr.mxu0 0.0
    %590 = vmatpush1.xpose.msra.mxu0 0.0
    %591 = vmatprep.subr.mxu0 0.0
    %592 = vmatpush1.xpose.msra.mxu0 0.0
    %593 = vmatprep.subr.mxu0 0.0
    %594 = vmatpush1.xpose.msra.mxu0 0.0
    %595 = vmatprep.subr.mxu0 0.0
    %596 = vmatpush1.xpose.msra.mxu0 0.0
    %597 = vmatprep.subr.mxu0 0.0
    %598 = vmatpush1.xpose.msra.mxu0 0.0
    %599 = vmatprep.subr.mxu0 0.0
    %600 = vmatpush1.xpose.msra.mxu0 0.0
    %601 = vmatprep.subr.mxu0 0.0
    %602 = vmatpush1.xpose.msra.mxu0 0.0
    %603 = vmatprep.subr.mxu0 0.0
    %604 = vmatpush1.xpose.msra.mxu0 %v87
    %605 = vmatprep.subr.mxu0 0.0
    %606 = vmatpush1.xpose.msra.mxu0 %v84
    %607 = vmatprep.subr.mxu0 0.0
    %608 = vmatpush2.xpose.msra.mxu0 0.0
    %609 = vmatprep.subr.mxu0 0.0
    %610 = vmatpush2.xpose.msra.mxu0 0.0
    %611 = vmatprep.subr.mxu0 0.0
    %612 = vmatpush2.xpose.msra.mxu0 0.0
    %613 = vmatprep.subr.mxu0 0.0
    %614 = vmatpush2.xpose.msra.mxu0 0.0
    %615 = vmatprep.subr.mxu0 0.0
    %616 = vmatpush2.xpose.msra.mxu0 0.0
    %617 = vmatprep.subr.mxu0 0.0
    %618 = vmatpush2.xpose.msra.mxu0 0.0
    %619 = vmatprep.subr.mxu0 0.0
    %620 = vmatpush2.xpose.msra.mxu0 0.0
    %621 = vmatprep.subr.mxu0 0.0
    %622 = vmatpush2.xpose.msra.mxu0 0.0
    %623 = vmatprep.subr.mxu0 0.0
    %624 = vmatpush2.xpose.msra.mxu0 0.0
    %625 = vmatprep.subr.mxu0 0.0
    %626 = vmatpush2.xpose.msra.mxu0 0.0
    %627 = vmatprep.subr.mxu0 0.0
    %628 = vmatpush2.xpose.msra.mxu0 0.0
    %629 = vmatprep.subr.mxu0 0.0
    %630 = vmatpush2.xpose.msra.mxu0 0.0
    %631 = vmatprep.subr.mxu0 0.0
    %632 = vmatpush2.xpose.msra.mxu0 0.0
    %633 = vmatprep.subr.mxu0 0.0
    %634 = vmatpush2.xpose.msra.mxu0 0.0
    %635 = vmatprep.subr.mxu0 0.0
    %636 = vmatpush2.xpose.msra.mxu0 0.0
    %637 = vmatprep.subr.mxu0 0.0
    %638 = vmatpush2.xpose.msra.mxu0 0.0
    %639 = vmatprep.mubr.f32.mxu0 0.0
    %640 = vmatmul.mubr.f32.gmra.mxu0 %v570
    %v641 = vpop.f32.mrf.mxu0
    %v642 = vadd.f32 0.0, %v641
    %v643 = vpop.f32.mrf.mxu0
    %644 = vmatprep.mubr.f32.mxu0 0.0
    %645 = vmatmul.mubr.f32.gmra.mxu0 %v573
    %v646 = vpop.f32.mrf.mxu0
    %v647 = vadd.f32 0.0, %v646
    %v648 = vpop.f32.mrf.mxu0
    %649 = vdwg.mxu0
    %v651 = vsel %vm76, %v70, 0
    %v654 = vsel %vm76, %v71, 0
    %656 = vmatprep.subr.mxu0 0.0
    %657 = vmatpush1.xpose.msra.mxu0 0.0
    %658 = vmatprep.subr.mxu0 0.0
    %659 = vmatpush1.xpose.msra.mxu0 0.0
    %660 = vmatprep.subr.mxu0 0.0
    %661 = vmatpush1.xpose.msra.mxu0 0.0
    %662 = vmatprep.subr.mxu0 0.0
    %663 = vmatpush1.xpose.msra.mxu0 0.0
    %664 = vmatprep.subr.mxu0 0.0
    %665 = vmatpush1.xpose.msra.mxu0 0.0
    %666 = vmatprep.subr.mxu0 0.0
    %667 = vmatpush1.xpose.msra.mxu0 0.0
    %668 = vmatprep.subr.mxu0 0.0
    %669 = vmatpush1.xpose.msra.mxu0 0.0
    %670 = vmatprep.subr.mxu0 0.0
    %671 = vmatpush1.xpose.msra.mxu0 0.0
    %672 = vmatprep.subr.mxu0 0.0
    %673 = vmatpush1.xpose.msra.mxu0 0.0
    %674 = vmatprep.subr.mxu0 0.0
    %675 = vmatpush1.xpose.msra.mxu0 0.0
    %676 = vmatprep.subr.mxu0 0.0
    %677 = vmatpush1.xpose.msra.mxu0 0.0
    %678 = vmatprep.subr.mxu0 0.0
    %679 = vmatpush1.xpose.msra.mxu0 0.0
    %680 = vmatprep.subr.mxu0 0.0
    %681 = vmatpush1.xpose.msra.mxu0 0.0
    %682 = vmatprep.subr.mxu0 0.0
    %683 = vmatpush1.xpose.msra.mxu0 0.0
    %684 = vmatprep.subr.mxu0 0.0
    %685 = vmatpush1.xpose.msra.mxu0 %v87
    %686 = vmatprep.subr.mxu0 0.0
    %687 = vmatpush1.xpose.msra.mxu0 %v84
    %688 = vmatprep.subr.mxu0 0.0
    %689 = vmatpush2.xpose.msra.mxu0 0.0
    %690 = vmatprep.subr.mxu0 0.0
    %691 = vmatpush2.xpose.msra.mxu0 0.0
    %692 = vmatprep.subr.mxu0 0.0
    %693 = vmatpush2.xpose.msra.mxu0 0.0
    %694 = vmatprep.subr.mxu0 0.0
    %695 = vmatpush2.xpose.msra.mxu0 0.0
    %696 = vmatprep.subr.mxu0 0.0
    %697 = vmatpush2.xpose.msra.mxu0 0.0
    %698 = vmatprep.subr.mxu0 0.0
    %699 = vmatpush2.xpose.msra.mxu0 0.0
    %700 = vmatprep.subr.mxu0 0.0
    %701 = vmatpush2.xpose.msra.mxu0 0.0
    %702 = vmatprep.subr.mxu0 0.0
    %703 = vmatpush2.xpose.msra.mxu0 0.0
    %704 = vmatprep.subr.mxu0 0.0
    %705 = vmatpush2.xpose.msra.mxu0 0.0
    %706 = vmatprep.subr.mxu0 0.0
    %707 = vmatpush2.xpose.msra.mxu0 0.0
    %708 = vmatprep.subr.mxu0 0.0
    %709 = vmatpush2.xpose.msra.mxu0 0.0
    %710 = vmatprep.subr.mxu0 0.0
    %711 = vmatpush2.xpose.msra.mxu0 0.0
    %712 = vmatprep.subr.mxu0 0.0
    %713 = vmatpush2.xpose.msra.mxu0 0.0
    %714 = vmatprep.subr.mxu0 0.0
    %715 = vmatpush2.xpose.msra.mxu0 0.0
    %716 = vmatprep.subr.mxu0 0.0
    %717 = vmatpush2.xpose.msra.mxu0 0.0
    %718 = vmatprep.subr.mxu0 0.0
    %719 = vmatpush2.xpose.msra.mxu0 0.0
    %720 = vmatprep.mubr.f32.mxu0 0.0
    %721 = vmatmul.mubr.f32.gmra.mxu0 %v651
    %v722 = vpop.f32.mrf.mxu0
    %v723 = vadd.f32 0.0, %v722
    %v724 = vpop.f32.mrf.mxu0
    %725 = vmatprep.mubr.f32.mxu0 0.0
    %726 = vmatmul.mubr.f32.gmra.mxu0 %v654
    %v727 = vpop.f32.mrf.mxu0
    %v728 = vadd.f32 0.0, %v727
    %v729 = vpop.f32.mrf.mxu0
    %730 = vdwg.mxu0
    %v732 = vsel %vm76, %v72, 0
    %v735 = vsel %vm76, %v73, 0
    %737 = vmatprep.subr.mxu0 0.0
    %738 = vmatpush1.msra.mxu0 0.0
    %739 = vmatprep.subr.mxu0 0.0
    %740 = vmatpush1.msra.mxu0 0.0
    %741 = vmatprep.subr.mxu0 0.0
    %742 = vmatpush1.msra.mxu0 0.0
    %743 = vmatprep.subr.mxu0 0.0
    %744 = vmatpush1.msra.mxu0 0.0
    %745 = vmatprep.subr.mxu0 0.0
    %746 = vmatpush1.msra.mxu0 0.0
    %747 = vmatprep.subr.mxu0 0.0
    %748 = vmatpush1.msra.mxu0 0.0
    %749 = vmatprep.subr.mxu0 0.0
    %750 = vmatpush1.msra.mxu0 0.0
    %751 = vmatprep.subr.mxu0 0.0
    %752 = vmatpush1.msra.mxu0 0.0
    %753 = vmatprep.subr.mxu0 0.0
    %754 = vmatpush1.msra.mxu0 0.0
    %755 = vmatprep.subr.mxu0 0.0
    %756 = vmatpush1.msra.mxu0 0.0
    %757 = vmatprep.subr.mxu0 0.0
    %758 = vmatpush1.msra.mxu0 0.0
    %759 = vmatprep.subr.mxu0 0.0
    %760 = vmatpush1.msra.mxu0 0.0
    %761 = vmatprep.subr.mxu0 0.0
    %762 = vmatpush1.msra.mxu0 0.0
    %763 = vmatprep.subr.mxu0 0.0
    %764 = vmatpush1.msra.mxu0 0.0
    %765 = vmatprep.subr.mxu0 0.0
    %766 = vmatpush1.msra.mxu0 %v161
    %767 = vmatprep.subr.mxu0 0.0
    %768 = vmatpush1.msra.mxu0 %v156
    %769 = vmatprep.subr.mxu0 0.0
    %770 = vmatpush2.msra.mxu0 0.0
    %771 = vmatprep.subr.mxu0 0.0
    %772 = vmatpush2.msra.mxu0 0.0
    %773 = vmatprep.subr.mxu0 0.0
    %774 = vmatpush2.msra.mxu0 0.0
    %775 = vmatprep.subr.mxu0 0.0
    %776 = vmatpush2.msra.mxu0 0.0
    %777 = vmatprep.subr.mxu0 0.0
    %778 = vmatpush2.msra.mxu0 0.0
    %779 = vmatprep.subr.mxu0 0.0
    %780 = vmatpush2.msra.mxu0 0.0
    %781 = vmatprep.subr.mxu0 0.0
    %782 = vmatpush2.msra.mxu0 0.0
    %783 = vmatprep.subr.mxu0 0.0
    %784 = vmatpush2.msra.mxu0 0.0
    %785 = vmatprep.subr.mxu0 0.0
    %786 = vmatpush2.msra.mxu0 0.0
    %787 = vmatprep.subr.mxu0 0.0
    %788 = vmatpush2.msra.mxu0 0.0
    %789 = vmatprep.subr.mxu0 0.0
    %790 = vmatpush2.msra.mxu0 0.0
    %791 = vmatprep.subr.mxu0 0.0
    %792 = vmatpush2.msra.mxu0 0.0
    %793 = vmatprep.subr.mxu0 0.0
    %794 = vmatpush2.msra.mxu0 0.0
    %795 = vmatprep.subr.mxu0 0.0
    %796 = vmatpush2.msra.mxu0 0.0
    %797 = vmatprep.subr.mxu0 0.0
    %798 = vmatpush2.msra.mxu0 0.0
    %799 = vmatprep.subr.mxu0 0.0
    %800 = vmatpush2.msra.mxu0 0.0
    %801 = vmatprep.mubr.f32.mxu0 0.0
    %802 = vmatmul.mubr.f32.gmra.mxu0 %v732
    %v803 = vpop.f32.mrf.mxu0
    %v804 = vadd.f32 0.0, %v803
    %v805 = vpop.f32.mrf.mxu0
    %806 = vmatprep.mubr.f32.mxu0 0.0
    %807 = vmatmul.mubr.f32.gmra.mxu0 %v735
    %v808 = vpop.f32.mrf.mxu0
    %v809 = vadd.f32 0.0, %v808
    %v810 = vpop.f32.mrf.mxu0
    %811 = vdwg.mxu0
    %812 = vmatprep.subr.mxu0 0.0
    %813 = vmatpush1.msra.mxu0 0.0
    %814 = vmatprep.subr.mxu0 0.0
    %815 = vmatpush1.msra.mxu0 0.0
    %816 = vmatprep.subr.mxu0 0.0
    %817 = vmatpush1.msra.mxu0 0.0
    %818 = vmatprep.subr.mxu0 0.0
    %819 = vmatpush1.msra.mxu0 0.0
    %820 = vmatprep.subr.mxu0 0.0
    %821 = vmatpush1.msra.mxu0 0.0
    %822 = vmatprep.subr.mxu0 0.0
    %823 = vmatpush1.msra.mxu0 0.0
    %824 = vmatprep.subr.mxu0 0.0
    %825 = vmatpush1.msra.mxu0 0.0
    %826 = vmatprep.subr.mxu0 0.0
    %827 = vmatpush1.msra.mxu0 0.0
    %828 = vmatprep.subr.mxu0 0.0
    %829 = vmatpush1.msra.mxu0 0.0
    %830 = vmatprep.subr.mxu0 0.0
    %831 = vmatpush1.msra.mxu0 0.0
    %832 = vmatprep.subr.mxu0 0.0
    %833 = vmatpush1.msra.mxu0 0.0
    %834 = vmatprep.subr.mxu0 0.0
    %835 = vmatpush1.msra.mxu0 0.0
    %836 = vmatprep.subr.mxu0 0.0
    %837 = vmatpush1.msra.mxu0 0.0
    %838 = vmatprep.subr.mxu0 0.0
    %839 = vmatpush1.msra.mxu0 0.0
    %840 = vmatprep.subr.mxu0 0.0
    %841 = vmatpush1.msra.mxu0 %v242
    %842 = vmatprep.subr.mxu0 0.0
    %843 = vmatpush1.msra.mxu0 %v237
    %844 = vmatprep.subr.mxu0 0.0
    %845 = vmatpush2.msra.mxu0 0.0
    %846 = vmatprep.subr.mxu0 0.0
    %847 = vmatpush2.msra.mxu0 0.0
    %848 = vmatprep.subr.mxu0 0.0
    %849 = vmatpush2.msra.mxu0 0.0
    %850 = vmatprep.subr.mxu0 0.0
    %851 = vmatpush2.msra.mxu0 0.0
    %852 = vmatprep.subr.mxu0 0.0
    %853 = vmatpush2.msra.mxu0 0.0
    %854 = vmatprep.subr.mxu0 0.0
    %855 = vmatpush2.msra.mxu0 0.0
    %856 = vmatprep.subr.mxu0 0.0
    %857 = vmatpush2.msra.mxu0 0.0
    %858 = vmatprep.subr.mxu0 0.0
    %859 = vmatpush2.msra.mxu0 0.0
    %860 = vmatprep.subr.mxu0 0.0
    %861 = vmatpush2.msra.mxu0 0.0
    %862 = vmatprep.subr.mxu0 0.0
    %863 = vmatpush2.msra.mxu0 0.0
    %864 = vmatprep.subr.mxu0 0.0
    %865 = vmatpush2.msra.mxu0 0.0
    %866 = vmatprep.subr.mxu0 0.0
    %867 = vmatpush2.msra.mxu0 0.0
    %868 = vmatprep.subr.mxu0 0.0
    %869 = vmatpush2.msra.mxu0 0.0
    %870 = vmatprep.subr.mxu0 0.0
    %871 = vmatpush2.msra.mxu0 0.0
    %872 = vmatprep.subr.mxu0 0.0
    %873 = vmatpush2.msra.mxu0 0.0
    %874 = vmatprep.subr.mxu0 0.0
    %875 = vmatpush2.msra.mxu0 0.0
    %876 = vmatprep.mubr.f32.mxu0 0.0
    %877 = vmatmul.mubr.f32.gmra.mxu0 %v732
    %v878 = vpop.f32.mrf.mxu0
    %v879 = vadd.f32 0.0, %v878
    %v880 = vpop.f32.mrf.mxu0
    %881 = vmatprep.mubr.f32.mxu0 0.0
    %882 = vmatmul.mubr.f32.gmra.mxu0 %v735
    %v883 = vpop.f32.mrf.mxu0
    %v884 = vadd.f32 0.0, %v883
    %v885 = vpop.f32.mrf.mxu0
    %886 = vdwg.mxu0
    %887 = vmatprep.subr.mxu0 0.0
    %888 = vmatpush1.msra.mxu0 0.0
    %889 = vmatprep.subr.mxu0 0.0
    %890 = vmatpush1.msra.mxu0 0.0
    %891 = vmatprep.subr.mxu0 0.0
    %892 = vmatpush1.msra.mxu0 0.0
    %893 = vmatprep.subr.mxu0 0.0
    %894 = vmatpush1.msra.mxu0 0.0
    %895 = vmatprep.subr.mxu0 0.0
    %896 = vmatpush1.msra.mxu0 0.0
    %897 = vmatprep.subr.mxu0 0.0
    %898 = vmatpush1.msra.mxu0 0.0
    %899 = vmatprep.subr.mxu0 0.0
    %900 = vmatpush1.msra.mxu0 0.0
    %901 = vmatprep.subr.mxu0 0.0
    %902 = vmatpush1.msra.mxu0 0.0
    %903 = vmatprep.subr.mxu0 0.0
    %904 = vmatpush1.msra.mxu0 0.0
    %905 = vmatprep.subr.mxu0 0.0
    %906 = vmatpush1.msra.mxu0 0.0
    %907 = vmatprep.subr.mxu0 0.0
    %908 = vmatpush1.msra.mxu0 0.0
    %909 = vmatprep.subr.mxu0 0.0
    %910 = vmatpush1.msra.mxu0 0.0
    %911 = vmatprep.subr.mxu0 0.0
    %912 = vmatpush1.msra.mxu0 0.0
    %913 = vmatprep.subr.mxu0 0.0
    %914 = vmatpush1.msra.mxu0 0.0
    %915 = vmatprep.subr.mxu0 0.0
    %916 = vmatpush1.msra.mxu0 %v323
    %917 = vmatprep.subr.mxu0 0.0
    %918 = vmatpush1.msra.mxu0 %v318
    %919 = vmatprep.subr.mxu0 0.0
    %920 = vmatpush2.msra.mxu0 0.0
    %921 = vmatprep.subr.mxu0 0.0
    %922 = vmatpush2.msra.mxu0 0.0
    %923 = vmatprep.subr.mxu0 0.0
    %924 = vmatpush2.msra.mxu0 0.0
    %925 = vmatprep.subr.mxu0 0.0
    %926 = vmatpush2.msra.mxu0 0.0
    %927 = vmatprep.subr.mxu0 0.0
    %928 = vmatpush2.msra.mxu0 0.0
    %929 = vmatprep.subr.mxu0 0.0
    %930 = vmatpush2.msra.mxu0 0.0
    %931 = vmatprep.subr.mxu0 0.0
    %932 = vmatpush2.msra.mxu0 0.0
    %933 = vmatprep.subr.mxu0 0.0
    %934 = vmatpush2.msra.mxu0 0.0
    %935 = vmatprep.subr.mxu0 0.0
    %936 = vmatpush2.msra.mxu0 0.0
    %937 = vmatprep.subr.mxu0 0.0
    %938 = vmatpush2.msra.mxu0 0.0
    %939 = vmatprep.subr.mxu0 0.0
    %940 = vmatpush2.msra.mxu0 0.0
    %941 = vmatprep.subr.mxu0 0.0
    %942 = vmatpush2.msra.mxu0 0.0
    %943 = vmatprep.subr.mxu0 0.0
    %944 = vmatpush2.msra.mxu0 0.0
    %945 = vmatprep.subr.mxu0 0.0
    %946 = vmatpush2.msra.mxu0 0.0
    %947 = vmatprep.subr.mxu0 0.0
    %948 = vmatpush2.msra.mxu0 0.0
    %949 = vmatprep.subr.mxu0 0.0
    %950 = vmatpush2.msra.mxu0 0.0
    %951 = vmatprep.mubr.f32.mxu0 0.0
    %952 = vmatmul.mubr.f32.gmra.mxu0 %v732
    %v953 = vpop.f32.mrf.mxu0
    %v954 = vadd.f32 0.0, %v953
    %v955 = vpop.f32.mrf.mxu0
    %956 = vmatprep.mubr.f32.mxu0 0.0
    %957 = vmatmul.mubr.f32.gmra.mxu0 %v735
    %v958 = vpop.f32.mrf.mxu0
    %v959 = vadd.f32 0.0, %v958
    %v960 = vpop.f32.mrf.mxu0
    %961 = vdwg.mxu0
    %962 = vmatprep.subr.mxu0 0.0
    %963 = vmatpush1.msra.mxu0 0.0
    %964 = vmatprep.subr.mxu0 0.0
    %965 = vmatpush1.msra.mxu0 0.0
    %966 = vmatprep.subr.mxu0 0.0
    %967 = vmatpush1.msra.mxu0 0.0
    %968 = vmatprep.subr.mxu0 0.0
    %969 = vmatpush1.msra.mxu0 0.0
    %970 = vmatprep.subr.mxu0 0.0
    %971 = vmatpush1.msra.mxu0 0.0
    %972 = vmatprep.subr.mxu0 0.0
    %973 = vmatpush1.msra.mxu0 0.0
    %974 = vmatprep.subr.mxu0 0.0
    %975 = vmatpush1.msra.mxu0 0.0
    %976 = vmatprep.subr.mxu0 0.0
    %977 = vmatpush1.msra.mxu0 0.0
    %978 = vmatprep.subr.mxu0 0.0
    %979 = vmatpush1.msra.mxu0 0.0
    %980 = vmatprep.subr.mxu0 0.0
    %981 = vmatpush1.msra.mxu0 0.0
    %982 = vmatprep.subr.mxu0 0.0
    %983 = vmatpush1.msra.mxu0 0.0
    %984 = vmatprep.subr.mxu0 0.0
    %985 = vmatpush1.msra.mxu0 0.0
    %986 = vmatprep.subr.mxu0 0.0
    %987 = vmatpush1.msra.mxu0 0.0
    %988 = vmatprep.subr.mxu0 0.0
    %989 = vmatpush1.msra.mxu0 0.0
    %990 = vmatprep.subr.mxu0 0.0
    %991 = vmatpush1.msra.mxu0 %v404
    %992 = vmatprep.subr.mxu0 0.0
    %993 = vmatpush1.msra.mxu0 %v399
    %994 = vmatprep.subr.mxu0 0.0
    %995 = vmatpush2.msra.mxu0 0.0
    %996 = vmatprep.subr.mxu0 0.0
    %997 = vmatpush2.msra.mxu0 0.0
    %998 = vmatprep.subr.mxu0 0.0
    %999 = vmatpush2.msra.mxu0 0.0
    %1000 = vmatprep.subr.mxu0 0.0
    %1001 = vmatpush2.msra.mxu0 0.0
    %1002 = vmatprep.subr.mxu0 0.0
    %1003 = vmatpush2.msra.mxu0 0.0
    %1004 = vmatprep.subr.mxu0 0.0
    %1005 = vmatpush2.msra.mxu0 0.0
    %1006 = vmatprep.subr.mxu0 0.0
    %1007 = vmatpush2.msra.mxu0 0.0
    %1008 = vmatprep.subr.mxu0 0.0
    %1009 = vmatpush2.msra.mxu0 0.0
    %1010 = vmatprep.subr.mxu0 0.0
    %1011 = vmatpush2.msra.mxu0 0.0
    %1012 = vmatprep.subr.mxu0 0.0
    %1013 = vmatpush2.msra.mxu0 0.0
    %1014 = vmatprep.subr.mxu0 0.0
    %1015 = vmatpush2.msra.mxu0 0.0
    %1016 = vmatprep.subr.mxu0 0.0
    %1017 = vmatpush2.msra.mxu0 0.0
    %1018 = vmatprep.subr.mxu0 0.0
    %1019 = vmatpush2.msra.mxu0 0.0
    %1020 = vmatprep.subr.mxu0 0.0
    %1021 = vmatpush2.msra.mxu0 0.0
    %1022 = vmatprep.subr.mxu0 0.0
    %1023 = vmatpush2.msra.mxu0 0.0
    %1024 = vmatprep.subr.mxu0 0.0
    %1025 = vmatpush2.msra.mxu0 0.0
    %1026 = vmatprep.mubr.f32.mxu0 0.0
    %1027 = vmatmul.mubr.f32.gmra.mxu0 %v732
    %v1028 = vpop.f32.mrf.mxu0
    %v1029 = vadd.f32 0.0, %v1028
    %v1030 = vpop.f32.mrf.mxu0
    %1031 = vmatprep.mubr.f32.mxu0 0.0
    %1032 = vmatmul.mubr.f32.gmra.mxu0 %v735
    %v1033 = vpop.f32.mrf.mxu0
    %v1034 = vadd.f32 0.0, %v1033
    %v1035 = vpop.f32.mrf.mxu0
    %1036 = vdwg.mxu0
    %1037 = vmatprep.subr.mxu0 0.0
    %1038 = vmatpush1.msra.mxu0 0.0
    %1039 = vmatprep.subr.mxu0 0.0
    %1040 = vmatpush1.msra.mxu0 0.0
    %1041 = vmatprep.subr.mxu0 0.0
    %1042 = vmatpush1.msra.mxu0 0.0
    %1043 = vmatprep.subr.mxu0 0.0
    %1044 = vmatpush1.msra.mxu0 0.0
    %1045 = vmatprep.subr.mxu0 0.0
    %1046 = vmatpush1.msra.mxu0 0.0
    %1047 = vmatprep.subr.mxu0 0.0
    %1048 = vmatpush1.msra.mxu0 0.0
    %1049 = vmatprep.subr.mxu0 0.0
    %1050 = vmatpush1.msra.mxu0 0.0
    %1051 = vmatprep.subr.mxu0 0.0
    %1052 = vmatpush1.msra.mxu0 0.0
    %1053 = vmatprep.subr.mxu0 0.0
    %1054 = vmatpush1.msra.mxu0 0.0
    %1055 = vmatprep.subr.mxu0 0.0
    %1056 = vmatpush1.msra.mxu0 0.0
    %1057 = vmatprep.subr.mxu0 0.0
    %1058 = vmatpush1.msra.mxu0 0.0
    %1059 = vmatprep.subr.mxu0 0.0
    %1060 = vmatpush1.msra.mxu0 0.0
    %1061 = vmatprep.subr.mxu0 0.0
    %1062 = vmatpush1.msra.mxu0 0.0
    %1063 = vmatprep.subr.mxu0 0.0
    %1064 = vmatpush1.msra.mxu0 0.0
    %1065 = vmatprep.subr.mxu0 0.0
    %1066 = vmatpush1.msra.mxu0 %v485
    %1067 = vmatprep.subr.mxu0 0.0
    %1068 = vmatpush1.msra.mxu0 %v480
    %1069 = vmatprep.subr.mxu0 0.0
    %1070 = vmatpush2.msra.mxu0 0.0
    %1071 = vmatprep.subr.mxu0 0.0
    %1072 = vmatpush2.msra.mxu0 0.0
    %1073 = vmatprep.subr.mxu0 0.0
    %1074 = vmatpush2.msra.mxu0 0.0
    %1075 = vmatprep.subr.mxu0 0.0
    %1076 = vmatpush2.msra.mxu0 0.0
    %1077 = vmatprep.subr.mxu0 0.0
    %1078 = vmatpush2.msra.mxu0 0.0
    %1079 = vmatprep.subr.mxu0 0.0
    %1080 = vmatpush2.msra.mxu0 0.0
    %1081 = vmatprep.subr.mxu0 0.0
    %1082 = vmatpush2.msra.mxu0 0.0
    %1083 = vmatprep.subr.mxu0 0.0
    %1084 = vmatpush2.msra.mxu0 0.0
    %1085 = vmatprep.subr.mxu0 0.0
    %1086 = vmatpush2.msra.mxu0 0.0
    %1087 = vmatprep.subr.mxu0 0.0
    %1088 = vmatpush2.msra.mxu0 0.0
    %1089 = vmatprep.subr.mxu0 0.0
    %1090 = vmatpush2.msra.mxu0 0.0
    %1091 = vmatprep.subr.mxu0 0.0
    %1092 = vmatpush2.msra.mxu0 0.0
    %1093 = vmatprep.subr.mxu0 0.0
    %1094 = vmatpush2.msra.mxu0 0.0
    %1095 = vmatprep.subr.mxu0 0.0
    %1096 = vmatpush2.msra.mxu0 0.0
    %1097 = vmatprep.subr.mxu0 0.0
    %1098 = vmatpush2.msra.mxu0 0.0
    %1099 = vmatprep.subr.mxu0 0.0
    %1100 = vmatpush2.msra.mxu0 0.0
    %1101 = vmatprep.mubr.f32.mxu0 0.0
    %1102 = vmatmul.mubr.f32.gmra.mxu0 %v732
    %v1103 = vpop.f32.mrf.mxu0
    %v1104 = vadd.f32 0.0, %v1103
    %v1105 = vpop.f32.mrf.mxu0
    %1106 = vmatprep.mubr.f32.mxu0 0.0
    %1107 = vmatmul.mubr.f32.gmra.mxu0 %v735
    %v1108 = vpop.f32.mrf.mxu0
    %v1109 = vadd.f32 0.0, %v1108
    %v1110 = vpop.f32.mrf.mxu0
    %1111 = vdwg.mxu0
    %1112 = vmatprep.subr.mxu0 0.0
    %1113 = vmatpush1.msra.mxu0 0.0
    %1114 = vmatprep.subr.mxu0 0.0
    %1115 = vmatpush1.msra.mxu0 0.0
    %1116 = vmatprep.subr.mxu0 0.0
    %1117 = vmatpush1.msra.mxu0 0.0
    %1118 = vmatprep.subr.mxu0 0.0
    %1119 = vmatpush1.msra.mxu0 0.0
    %1120 = vmatprep.subr.mxu0 0.0
    %1121 = vmatpush1.msra.mxu0 0.0
    %1122 = vmatprep.subr.mxu0 0.0
    %1123 = vmatpush1.msra.mxu0 0.0
    %1124 = vmatprep.subr.mxu0 0.0
    %1125 = vmatpush1.msra.mxu0 0.0
    %1126 = vmatprep.subr.mxu0 0.0
    %1127 = vmatpush1.msra.mxu0 0.0
    %1128 = vmatprep.subr.mxu0 0.0
    %1129 = vmatpush1.msra.mxu0 0.0
    %1130 = vmatprep.subr.mxu0 0.0
    %1131 = vmatpush1.msra.mxu0 0.0
    %1132 = vmatprep.subr.mxu0 0.0
    %1133 = vmatpush1.msra.mxu0 0.0
    %1134 = vmatprep.subr.mxu0 0.0
    %1135 = vmatpush1.msra.mxu0 0.0
    %1136 = vmatprep.subr.mxu0 0.0
    %1137 = vmatpush1.msra.mxu0 0.0
    %1138 = vmatprep.subr.mxu0 0.0
    %1139 = vmatpush1.msra.mxu0 0.0
    %1140 = vmatprep.subr.mxu0 0.0
    %1141 = vmatpush1.msra.mxu0 %v566
    %1142 = vmatprep.subr.mxu0 0.0
    %1143 = vmatpush1.msra.mxu0 %v561
    %1144 = vmatprep.subr.mxu0 0.0
    %1145 = vmatpush2.msra.mxu0 0.0
    %1146 = vmatprep.subr.mxu0 0.0
    %1147 = vmatpush2.msra.mxu0 0.0
    %1148 = vmatprep.subr.mxu0 0.0
    %1149 = vmatpush2.msra.mxu0 0.0
    %1150 = vmatprep.subr.mxu0 0.0
    %1151 = vmatpush2.msra.mxu0 0.0
    %1152 = vmatprep.subr.mxu0 0.0
    %1153 = vmatpush2.msra.mxu0 0.0
    %1154 = vmatprep.subr.mxu0 0.0
    %1155 = vmatpush2.msra.mxu0 0.0
    %1156 = vmatprep.subr.mxu0 0.0
    %1157 = vmatpush2.msra.mxu0 0.0
    %1158 = vmatprep.subr.mxu0 0.0
    %1159 = vmatpush2.msra.mxu0 0.0
    %1160 = vmatprep.subr.mxu0 0.0
    %1161 = vmatpush2.msra.mxu0 0.0
    %1162 = vmatprep.subr.mxu0 0.0
    %1163 = vmatpush2.msra.mxu0 0.0
    %1164 = vmatprep.subr.mxu0 0.0
    %1165 = vmatpush2.msra.mxu0 0.0
    %1166 = vmatprep.subr.mxu0 0.0
    %1167 = vmatpush2.msra.mxu0 0.0
    %1168 = vmatprep.subr.mxu0 0.0
    %1169 = vmatpush2.msra.mxu0 0.0
    %1170 = vmatprep.subr.mxu0 0.0
    %1171 = vmatpush2.msra.mxu0 0.0
    %1172 = vmatprep.subr.mxu0 0.0
    %1173 = vmatpush2.msra.mxu0 0.0
    %1174 = vmatprep.subr.mxu0 0.0
    %1175 = vmatpush2.msra.mxu0 0.0
    %1176 = vmatprep.mubr.f32.mxu0 0.0
    %1177 = vmatmul.mubr.f32.gmra.mxu0 %v732
    %v1178 = vpop.f32.mrf.mxu0
    %v1179 = vadd.f32 0.0, %v1178
    %v1180 = vpop.f32.mrf.mxu0
    %1181 = vmatprep.mubr.f32.mxu0 0.0
    %1182 = vmatmul.mubr.f32.gmra.mxu0 %v735
    %v1183 = vpop.f32.mrf.mxu0
    %v1184 = vadd.f32 0.0, %v1183
    %v1185 = vpop.f32.mrf.mxu0
    %1186 = vdwg.mxu0
    %1187 = vmatprep.subr.mxu0 0.0
    %1188 = vmatpush1.msra.mxu0 0.0
    %1189 = vmatprep.subr.mxu0 0.0
    %1190 = vmatpush1.msra.mxu0 0.0
    %1191 = vmatprep.subr.mxu0 0.0
    %1192 = vmatpush1.msra.mxu0 0.0
    %1193 = vmatprep.subr.mxu0 0.0
    %1194 = vmatpush1.msra.mxu0 0.0
    %1195 = vmatprep.subr.mxu0 0.0
    %1196 = vmatpush1.msra.mxu0 0.0
    %1197 = vmatprep.subr.mxu0 0.0
    %1198 = vmatpush1.msra.mxu0 0.0
    %1199 = vmatprep.subr.mxu0 0.0
    %1200 = vmatpush1.msra.mxu0 0.0
    %1201 = vmatprep.subr.mxu0 0.0
    %1202 = vmatpush1.msra.mxu0 0.0
    %1203 = vmatprep.subr.mxu0 0.0
    %1204 = vmatpush1.msra.mxu0 0.0
    %1205 = vmatprep.subr.mxu0 0.0
    %1206 = vmatpush1.msra.mxu0 0.0
    %1207 = vmatprep.subr.mxu0 0.0
    %1208 = vmatpush1.msra.mxu0 0.0
    %1209 = vmatprep.subr.mxu0 0.0
    %1210 = vmatpush1.msra.mxu0 0.0
    %1211 = vmatprep.subr.mxu0 0.0
    %1212 = vmatpush1.msra.mxu0 0.0
    %1213 = vmatprep.subr.mxu0 0.0
    %1214 = vmatpush1.msra.mxu0 0.0
    %1215 = vmatprep.subr.mxu0 0.0
    %1216 = vmatpush1.msra.mxu0 %v647
    %1217 = vmatprep.subr.mxu0 0.0
    %1218 = vmatpush1.msra.mxu0 %v642
    %1219 = vmatprep.subr.mxu0 0.0
    %1220 = vmatpush2.msra.mxu0 0.0
    %1221 = vmatprep.subr.mxu0 0.0
    %1222 = vmatpush2.msra.mxu0 0.0
    %1223 = vmatprep.subr.mxu0 0.0
    %1224 = vmatpush2.msra.mxu0 0.0
    %1225 = vmatprep.subr.mxu0 0.0
    %1226 = vmatpush2.msra.mxu0 0.0
    %1227 = vmatprep.subr.mxu0 0.0
    %1228 = vmatpush2.msra.mxu0 0.0
    %1229 = vmatprep.subr.mxu0 0.0
    %1230 = vmatpush2.msra.mxu0 0.0
    %1231 = vmatprep.subr.mxu0 0.0
    %1232 = vmatpush2.msra.mxu0 0.0
    %1233 = vmatprep.subr.mxu0 0.0
    %1234 = vmatpush2.msra.mxu0 0.0
    %1235 = vmatprep.subr.mxu0 0.0
    %1236 = vmatpush2.msra.mxu0 0.0
    %1237 = vmatprep.subr.mxu0 0.0
    %1238 = vmatpush2.msra.mxu0 0.0
    %1239 = vmatprep.subr.mxu0 0.0
    %1240 = vmatpush2.msra.mxu0 0.0
    %1241 = vmatprep.subr.mxu0 0.0
    %1242 = vmatpush2.msra.mxu0 0.0
    %1243 = vmatprep.subr.mxu0 0.0
    %1244 = vmatpush2.msra.mxu0 0.0
    %1245 = vmatprep.subr.mxu0 0.0
    %1246 = vmatpush2.msra.mxu0 0.0
    %1247 = vmatprep.subr.mxu0 0.0
    %1248 = vmatpush2.msra.mxu0 0.0
    %1249 = vmatprep.subr.mxu0 0.0
    %1250 = vmatpush2.msra.mxu0 0.0
    %1251 = vmatprep.mubr.f32.mxu0 0.0
    %1252 = vmatmul.mubr.f32.gmra.mxu0 %v732
    %v1253 = vpop.f32.mrf.mxu0
    %v1254 = vadd.f32 0.0, %v1253
    %v1255 = vpop.f32.mrf.mxu0
    %1256 = vmatprep.mubr.f32.mxu0 0.0
    %1257 = vmatmul.mubr.f32.gmra.mxu0 %v735
    %v1258 = vpop.f32.mrf.mxu0
    %v1259 = vadd.f32 0.0, %v1258
    %v1260 = vpop.f32.mrf.mxu0
    %1261 = vdwg.mxu0
    %1262 = vmatprep.subr.mxu0 0.0
    %1263 = vmatpush1.msra.mxu0 0.0
    %1264 = vmatprep.subr.mxu0 0.0
    %1265 = vmatpush1.msra.mxu0 0.0
    %1266 = vmatprep.subr.mxu0 0.0
    %1267 = vmatpush1.msra.mxu0 0.0
    %1268 = vmatprep.subr.mxu0 0.0
    %1269 = vmatpush1.msra.mxu0 0.0
    %1270 = vmatprep.subr.mxu0 0.0
    %1271 = vmatpush1.msra.mxu0 0.0
    %1272 = vmatprep.subr.mxu0 0.0
    %1273 = vmatpush1.msra.mxu0 0.0
    %1274 = vmatprep.subr.mxu0 0.0
    %1275 = vmatpush1.msra.mxu0 0.0
    %1276 = vmatprep.subr.mxu0 0.0
    %1277 = vmatpush1.msra.mxu0 0.0
    %1278 = vmatprep.subr.mxu0 0.0
    %1279 = vmatpush1.msra.mxu0 0.0
    %1280 = vmatprep.subr.mxu0 0.0
    %1281 = vmatpush1.msra.mxu0 0.0
    %1282 = vmatprep.subr.mxu0 0.0
    %1283 = vmatpush1.msra.mxu0 0.0
    %1284 = vmatprep.subr.mxu0 0.0
    %1285 = vmatpush1.msra.mxu0 0.0
    %1286 = vmatprep.subr.mxu0 0.0
    %1287 = vmatpush1.msra.mxu0 0.0
    %1288 = vmatprep.subr.mxu0 0.0
    %1289 = vmatpush1.msra.mxu0 0.0
    %1290 = vmatprep.subr.mxu0 0.0
    %1291 = vmatpush1.msra.mxu0 %v728
    %1292 = vmatprep.subr.mxu0 0.0
    %1293 = vmatpush1.msra.mxu0 %v723
    %1294 = vmatprep.subr.mxu0 0.0
    %1295 = vmatpush2.msra.mxu0 0.0
    %1296 = vmatprep.subr.mxu0 0.0
    %1297 = vmatpush2.msra.mxu0 0.0
    %1298 = vmatprep.subr.mxu0 0.0
    %1299 = vmatpush2.msra.mxu0 0.0
    %1300 = vmatprep.subr.mxu0 0.0
    %1301 = vmatpush2.msra.mxu0 0.0
    %1302 = vmatprep.subr.mxu0 0.0
    %1303 = vmatpush2.msra.mxu0 0.0
    %1304 = vmatprep.subr.mxu0 0.0
    %1305 = vmatpush2.msra.mxu0 0.0
    %1306 = vmatprep.subr.mxu0 0.0
    %1307 = vmatpush2.msra.mxu0 0.0
    %1308 = vmatprep.subr.mxu0 0.0
    %1309 = vmatpush2.msra.mxu0 0.0
    %1310 = vmatprep.subr.mxu0 0.0
    %1311 = vmatpush2.msra.mxu0 0.0
    %1312 = vmatprep.subr.mxu0 0.0
    %1313 = vmatpush2.msra.mxu0 0.0
    %1314 = vmatprep.subr.mxu0 0.0
    %1315 = vmatpush2.msra.mxu0 0.0
    %1316 = vmatprep.subr.mxu0 0.0
    %1317 = vmatpush2.msra.mxu0 0.0
    %1318 = vmatprep.subr.mxu0 0.0
    %1319 = vmatpush2.msra.mxu0 0.0
    %1320 = vmatprep.subr.mxu0 0.0
    %1321 = vmatpush2.msra.mxu0 0.0
    %1322 = vmatprep.subr.mxu0 0.0
    %1323 = vmatpush2.msra.mxu0 0.0
    %1324 = vmatprep.subr.mxu0 0.0
    %1325 = vmatpush2.msra.mxu0 0.0
    %1326 = vmatprep.mubr.f32.mxu0 0.0
    %1327 = vmatmul.mubr.f32.gmra.mxu0 %v732
    %v1328 = vpop.f32.mrf.mxu0
    %v1329 = vadd.f32 0.0, %v1328
    %v1330 = vpop.f32.mrf.mxu0
    %1331 = vmatprep.mubr.f32.mxu0 0.0
    %1332 = vmatmul.mubr.f32.gmra.mxu0 %v735
    %v1333 = vpop.f32.mrf.mxu0
    %v1334 = vadd.f32 0.0, %v1333
    %v1335 = vpop.f32.mrf.mxu0
    %1336 = vdwg.mxu0
    %v1337 = vsub.f32 %v56, %v804
    %v1338 = vsub.f32 %v57, %v809
    %v1339 = vsub.f32 %v58, %v879
    %v1340 = vsub.f32 %v59, %v884
    %v1341 = vsub.f32 %v60, %v954
    %v1342 = vsub.f32 %v61, %v959
    %v1343 = vsub.f32 %v62, %v1029
    %v1344 = vsub.f32 %v63, %v1034
    %v1345 = vsub.f32 %v64, %v1104
    %v1346 = vsub.f32 %v65, %v1109
    %v1347 = vsub.f32 %v66, %v1179
    %v1348 = vsub.f32 %v67, %v1184
    %v1349 = vsub.f32 %v68, %v1254
    %v1350 = vsub.f32 %v69, %v1259
    %v1351 = vsub.f32 %v70, %v1329
    %v1352 = vsub.f32 %v71, %v1334
    %v1353 = vand.u32 2147483647, %v1337
    %v1354 = vand.u32 2147483647, %v1338
    %v1355 = vand.u32 2147483647, %v1339
    %v1356 = vand.u32 2147483647, %v1340
    %v1357 = vand.u32 2147483647, %v1341
    %v1358 = vand.u32 2147483647, %v1342
    %v1359 = vand.u32 2147483647, %v1343
    %v1360 = vand.u32 2147483647, %v1344
    %v1361 = vand.u32 2147483647, %v1345
    %v1362 = vand.u32 2147483647, %v1346
    %v1363 = vand.u32 2147483647, %v1347
    %v1364 = vand.u32 2147483647, %v1348
    %v1365 = vand.u32 2147483647, %v1349
    %v1366 = vand.u32 2147483647, %v1350
    %v1367 = vand.u32 2147483647, %v1351
    %v1368 = vand.u32 2147483647, %v1352
    %v1369 = vmul.f32 %v1353, 255.0
    %v1370 = vmul.f32 %v1354, 255.0
    %v1371 = vmul.f32 %v1355, 255.0
    %v1372 = vmul.f32 %v1356, 255.0
    %v1373 = vmul.f32 %v1357, 255.0
    %v1374 = vmul.f32 %v1358, 255.0
    %v1375 = vmul.f32 %v1359, 255.0
    %v1376 = vmul.f32 %v1360, 255.0
    %v1377 = vmul.f32 %v1361, 255.0
    %v1378 = vmul.f32 %v1362, 255.0
    %v1379 = vmul.f32 %v1363, 255.0
    %v1380 = vmul.f32 %v1364, 255.0
    %v1381 = vmul.f32 %v1365, 255.0
    %v1382 = vmul.f32 %v1366, 255.0
    %v1383 = vmul.f32 %v1367, 255.0
    %v1384 = vmul.f32 %v1368, 255.0
    %vm1385 = vcmp.gt.f32.partialorder %v1369, 10.0
    %vm1386 = vcmp.gt.f32.partialorder %v1370, 10.0
    %vm1387 = vcmp.gt.f32.partialorder %v1371, 10.0
    %vm1388 = vcmp.gt.f32.partialorder %v1372, 10.0
    %vm1389 = vcmp.gt.f32.partialorder %v1373, 10.0
    %vm1390 = vcmp.gt.f32.partialorder %v1374, 10.0
    %vm1391 = vcmp.gt.f32.partialorder %v1375, 10.0
    %vm1392 = vcmp.gt.f32.partialorder %v1376, 10.0
    %vm1393 = vcmp.gt.f32.partialorder %v1377, 10.0
    %vm1394 = vcmp.gt.f32.partialorder %v1378, 10.0
    %vm1395 = vcmp.gt.f32.partialorder %v1379, 10.0
    %vm1396 = vcmp.gt.f32.partialorder %v1380, 10.0
    %vm1397 = vcmp.gt.f32.partialorder %v1381, 10.0
    %vm1398 = vcmp.gt.f32.partialorder %v1382, 10.0
    %vm1399 = vcmp.gt.f32.partialorder %v1383, 10.0
    %vm1400 = vcmp.gt.f32.partialorder %v1384, 10.0
    %v1401 = vsel %vm1385, 1, 0
    %v1402 = vsel %vm1386, 1, 0
    %v1403 = vsel %vm1387, 1, 0
    %v1404 = vsel %vm1388, 1, 0
    %v1405 = vsel %vm1389, 1, 0
    %v1406 = vsel %vm1390, 1, 0
    %v1407 = vsel %vm1391, 1, 0
    %v1408 = vsel %vm1392, 1, 0
    %v1409 = vsel %vm1393, 1, 0
    %v1410 = vsel %vm1394, 1, 0
    %v1411 = vsel %vm1395, 1, 0
    %v1412 = vsel %vm1396, 1, 0
    %v1413 = vsel %vm1397, 1, 0
    %v1414 = vsel %vm1398, 1, 0
    %v1415 = vsel %vm1399, 1, 0
    %v1416 = vsel %vm1400, 1, 0
    %v1417 = vcvt.s32.f32 %v1401
    %v1418 = vcvt.s32.f32 %v1402
    %v1419 = vcvt.s32.f32 %v1403
    %v1420 = vcvt.s32.f32 %v1404
    %v1421 = vcvt.s32.f32 %v1405
    %v1422 = vcvt.s32.f32 %v1406
    %v1423 = vcvt.s32.f32 %v1407
    %v1424 = vcvt.s32.f32 %v1408
    %v1425 = vcvt.s32.f32 %v1409
    %v1426 = vcvt.s32.f32 %v1410
    %v1427 = vcvt.s32.f32 %v1411
    %v1428 = vcvt.s32.f32 %v1412
    %v1429 = vcvt.s32.f32 %v1413
    %v1430 = vcvt.s32.f32 %v1414
    %v1431 = vcvt.s32.f32 %v1415
    %v1432 = vcvt.s32.f32 %v1416
    %v1433 = vmul.f32 %v1337, 0.5
    %v1434 = vmul.f32 %v1338, 0.5
    %v1435 = vmul.f32 %v1339, 0.5
    %v1436 = vmul.f32 %v1340, 0.5
    %v1437 = vmul.f32 %v1341, 0.5
    %v1438 = vmul.f32 %v1342, 0.5
    %v1439 = vmul.f32 %v1343, 0.5
    %v1440 = vmul.f32 %v1344, 0.5
    %v1441 = vmul.f32 %v1345, 0.5
    %v1442 = vmul.f32 %v1346, 0.5
    %v1443 = vmul.f32 %v1347, 0.5
    %v1444 = vmul.f32 %v1348, 0.5
    %v1445 = vmul.f32 %v1349, 0.5
    %v1446 = vmul.f32 %v1350, 0.5
    %v1447 = vmul.f32 %v1351, 0.5
    %v1448 = vmul.f32 %v1352, 0.5
    %v1449 = vadd.f32 %v56, %v1433
    %v1450 = vadd.f32 %v57, %v1434
    %v1451 = vadd.f32 %v58, %v1435
    %v1452 = vadd.f32 %v59, %v1436
    %v1453 = vadd.f32 %v60, %v1437
    %v1454 = vadd.f32 %v61, %v1438
    %v1455 = vadd.f32 %v62, %v1439
    %v1456 = vadd.f32 %v63, %v1440
    %v1457 = vadd.f32 %v64, %v1441
    %v1458 = vadd.f32 %v65, %v1442
    %v1459 = vadd.f32 %v66, %v1443
    %v1460 = vadd.f32 %v67, %v1444
    %v1461 = vadd.f32 %v68, %v1445
    %v1462 = vadd.f32 %v69, %v1446
    %v1463 = vadd.f32 %v70, %v1447
    %v1464 = vadd.f32 %v71, %v1448
    %v1465 = vmax.f32 %v1449, 0.0
    %v1466 = vmax.f32 %v1450, 0.0
    %v1467 = vmax.f32 %v1451, 0.0
    %v1468 = vmax.f32 %v1452, 0.0
    %v1469 = vmax.f32 %v1453, 0.0
    %v1470 = vmax.f32 %v1454, 0.0
    %v1471 = vmax.f32 %v1455, 0.0
    %v1472 = vmax.f32 %v1456, 0.0
    %v1473 = vmax.f32 %v1457, 0.0
    %v1474 = vmax.f32 %v1458, 0.0
    %v1475 = vmax.f32 %v1459, 0.0
    %v1476 = vmax.f32 %v1460, 0.0
    %v1477 = vmax.f32 %v1461, 0.0
    %v1478 = vmax.f32 %v1462, 0.0
    %v1479 = vmax.f32 %v1463, 0.0
    %v1480 = vmax.f32 %v1464, 0.0
    %v1481 = vmin.f32 %v1465, 1.0
    %v1482 = vmin.f32 %v1466, 1.0
    %v1483 = vmin.f32 %v1467, 1.0
    %v1484 = vmin.f32 %v1468, 1.0
    %v1485 = vmin.f32 %v1469, 1.0
    %v1486 = vmin.f32 %v1470, 1.0
    %v1487 = vmin.f32 %v1471, 1.0
    %v1488 = vmin.f32 %v1472, 1.0
    %v1489 = vmin.f32 %v1473, 1.0
    %v1490 = vmin.f32 %v1474, 1.0
    %v1491 = vmin.f32 %v1475, 1.0
    %v1492 = vmin.f32 %v1476, 1.0
    %v1493 = vmin.f32 %v1477, 1.0
    %v1494 = vmin.f32 %v1478, 1.0
    %v1495 = vmin.f32 %v1479, 1.0
    %v1496 = vmin.f32 %v1480, 1.0
    %v1498 = vsel %vm76, %v1417, 0
    %v1501 = vsel %vm76, %v1418, 0
    %1503 = vmatprep.subr.mxu0 0.0
    %1504 = vmatpush1.xpose.msra.mxu0 0.0
    %1505 = vmatprep.subr.mxu0 0.0
    %1506 = vmatpush1.xpose.msra.mxu0 0.0
    %1507 = vmatprep.subr.mxu0 0.0
    %1508 = vmatpush1.xpose.msra.mxu0 0.0
    %1509 = vmatprep.subr.mxu0 0.0
    %1510 = vmatpush1.xpose.msra.mxu0 0.0
    %1511 = vmatprep.subr.mxu0 0.0
    %1512 = vmatpush1.xpose.msra.mxu0 0.0
    %1513 = vmatprep.subr.mxu0 0.0
    %1514 = vmatpush1.xpose.msra.mxu0 0.0
    %1515 = vmatprep.subr.mxu0 0.0
    %1516 = vmatpush1.xpose.msra.mxu0 0.0
    %1517 = vmatprep.subr.mxu0 0.0
    %1518 = vmatpush1.xpose.msra.mxu0 0.0
    %1519 = vmatprep.subr.mxu0 0.0
    %1520 = vmatpush1.xpose.msra.mxu0 0.0
    %1521 = vmatprep.subr.mxu0 0.0
    %1522 = vmatpush1.xpose.msra.mxu0 0.0
    %1523 = vmatprep.subr.mxu0 0.0
    %1524 = vmatpush1.xpose.msra.mxu0 0.0
    %1525 = vmatprep.subr.mxu0 0.0
    %1526 = vmatpush1.xpose.msra.mxu0 0.0
    %1527 = vmatprep.subr.mxu0 0.0
    %1528 = vmatpush1.xpose.msra.mxu0 0.0
    %1529 = vmatprep.subr.mxu0 0.0
    %1530 = vmatpush1.xpose.msra.mxu0 0.0
    %1531 = vmatprep.subr.mxu0 0.0
    %1532 = vmatpush1.xpose.msra.mxu0 %v87
    %1533 = vmatprep.subr.mxu0 0.0
    %1534 = vmatpush1.xpose.msra.mxu0 %v84
    %1535 = vmatprep.subr.mxu0 0.0
    %1536 = vmatpush2.xpose.msra.mxu0 0.0
    %1537 = vmatprep.subr.mxu0 0.0
    %1538 = vmatpush2.xpose.msra.mxu0 0.0
    %1539 = vmatprep.subr.mxu0 0.0
    %1540 = vmatpush2.xpose.msra.mxu0 0.0
    %1541 = vmatprep.subr.mxu0 0.0
    %1542 = vmatpush2.xpose.msra.mxu0 0.0
    %1543 = vmatprep.subr.mxu0 0.0
    %1544 = vmatpush2.xpose.msra.mxu0 0.0
    %1545 = vmatprep.subr.mxu0 0.0
    %1546 = vmatpush2.xpose.msra.mxu0 0.0
    %1547 = vmatprep.subr.mxu0 0.0
    %1548 = vmatpush2.xpose.msra.mxu0 0.0
    %1549 = vmatprep.subr.mxu0 0.0
    %1550 = vmatpush2.xpose.msra.mxu0 0.0
    %1551 = vmatprep.subr.mxu0 0.0
    %1552 = vmatpush2.xpose.msra.mxu0 0.0
    %1553 = vmatprep.subr.mxu0 0.0
    %1554 = vmatpush2.xpose.msra.mxu0 0.0
    %1555 = vmatprep.subr.mxu0 0.0
    %1556 = vmatpush2.xpose.msra.mxu0 0.0
    %1557 = vmatprep.subr.mxu0 0.0
    %1558 = vmatpush2.xpose.msra.mxu0 0.0
    %1559 = vmatprep.subr.mxu0 0.0
    %1560 = vmatpush2.xpose.msra.mxu0 0.0
    %1561 = vmatprep.subr.mxu0 0.0
    %1562 = vmatpush2.xpose.msra.mxu0 0.0
    %1563 = vmatprep.subr.mxu0 0.0
    %1564 = vmatpush2.xpose.msra.mxu0 0.0
    %1565 = vmatprep.subr.mxu0 0.0
    %1566 = vmatpush2.xpose.msra.mxu0 0.0
    %1567 = vmatprep.mubr.f32.mxu0 0.0
    %1568 = vmatmul.mubr.f32.gmra.mxu0 %v1498
    %v1569 = vpop.f32.mrf.mxu0
    %v1570 = vadd.f32 0.0, %v1569
    %v1571 = vpop.f32.mrf.mxu0
    %1572 = vmatprep.mubr.f32.mxu0 0.0
    %1573 = vmatmul.mubr.f32.gmra.mxu0 %v1501
    %v1574 = vpop.f32.mrf.mxu0
    %v1575 = vadd.f32 0.0, %v1574
    %v1576 = vpop.f32.mrf.mxu0
    %1577 = vdwg.mxu0
    %v1579 = vsel %vm76, %v1419, 0
    %v1582 = vsel %vm76, %v1420, 0
    %1584 = vmatprep.subr.mxu0 0.0
    %1585 = vmatpush1.xpose.msra.mxu0 0.0
    %1586 = vmatprep.subr.mxu0 0.0
    %1587 = vmatpush1.xpose.msra.mxu0 0.0
    %1588 = vmatprep.subr.mxu0 0.0
    %1589 = vmatpush1.xpose.msra.mxu0 0.0
    %1590 = vmatprep.subr.mxu0 0.0
    %1591 = vmatpush1.xpose.msra.mxu0 0.0
    %1592 = vmatprep.subr.mxu0 0.0
    %1593 = vmatpush1.xpose.msra.mxu0 0.0
    %1594 = vmatprep.subr.mxu0 0.0
    %1595 = vmatpush1.xpose.msra.mxu0 0.0
    %1596 = vmatprep.subr.mxu0 0.0
    %1597 = vmatpush1.xpose.msra.mxu0 0.0
    %1598 = vmatprep.subr.mxu0 0.0
    %1599 = vmatpush1.xpose.msra.mxu0 0.0
    %1600 = vmatprep.subr.mxu0 0.0
    %1601 = vmatpush1.xpose.msra.mxu0 0.0
    %1602 = vmatprep.subr.mxu0 0.0
    %1603 = vmatpush1.xpose.msra.mxu0 0.0
    %1604 = vmatprep.subr.mxu0 0.0
    %1605 = vmatpush1.xpose.msra.mxu0 0.0
    %1606 = vmatprep.subr.mxu0 0.0
    %1607 = vmatpush1.xpose.msra.mxu0 0.0
    %1608 = vmatprep.subr.mxu0 0.0
    %1609 = vmatpush1.xpose.msra.mxu0 0.0
    %1610 = vmatprep.subr.mxu0 0.0
    %1611 = vmatpush1.xpose.msra.mxu0 0.0
    %1612 = vmatprep.subr.mxu0 0.0
    %1613 = vmatpush1.xpose.msra.mxu0 %v87
    %1614 = vmatprep.subr.mxu0 0.0
    %1615 = vmatpush1.xpose.msra.mxu0 %v84
    %1616 = vmatprep.subr.mxu0 0.0
    %1617 = vmatpush2.xpose.msra.mxu0 0.0
    %1618 = vmatprep.subr.mxu0 0.0
    %1619 = vmatpush2.xpose.msra.mxu0 0.0
    %1620 = vmatprep.subr.mxu0 0.0
    %1621 = vmatpush2.xpose.msra.mxu0 0.0
    %1622 = vmatprep.subr.mxu0 0.0
    %1623 = vmatpush2.xpose.msra.mxu0 0.0
    %1624 = vmatprep.subr.mxu0 0.0
    %1625 = vmatpush2.xpose.msra.mxu0 0.0
    %1626 = vmatprep.subr.mxu0 0.0
    %1627 = vmatpush2.xpose.msra.mxu0 0.0
    %1628 = vmatprep.subr.mxu0 0.0
    %1629 = vmatpush2.xpose.msra.mxu0 0.0
    %1630 = vmatprep.subr.mxu0 0.0
    %1631 = vmatpush2.xpose.msra.mxu0 0.0
    %1632 = vmatprep.subr.mxu0 0.0
    %1633 = vmatpush2.xpose.msra.mxu0 0.0
    %1634 = vmatprep.subr.mxu0 0.0
    %1635 = vmatpush2.xpose.msra.mxu0 0.0
    %1636 = vmatprep.subr.mxu0 0.0
    %1637 = vmatpush2.xpose.msra.mxu0 0.0
    %1638 = vmatprep.subr.mxu0 0.0
    %1639 = vmatpush2.xpose.msra.mxu0 0.0
    %1640 = vmatprep.subr.mxu0 0.0
    %1641 = vmatpush2.xpose.msra.mxu0 0.0
    %1642 = vmatprep.subr.mxu0 0.0
    %1643 = vmatpush2.xpose.msra.mxu0 0.0
    %1644 = vmatprep.subr.mxu0 0.0
    %1645 = vmatpush2.xpose.msra.mxu0 0.0
    %1646 = vmatprep.subr.mxu0 0.0
    %1647 = vmatpush2.xpose.msra.mxu0 0.0
    %1648 = vmatprep.mubr.f32.mxu0 0.0
    %1649 = vmatmul.mubr.f32.gmra.mxu0 %v1579
    %v1650 = vpop.f32.mrf.mxu0
    %v1651 = vadd.f32 0.0, %v1650
    %v1652 = vpop.f32.mrf.mxu0
    %1653 = vmatprep.mubr.f32.mxu0 0.0
    %1654 = vmatmul.mubr.f32.gmra.mxu0 %v1582
    %v1655 = vpop.f32.mrf.mxu0
    %v1656 = vadd.f32 0.0, %v1655
    %v1657 = vpop.f32.mrf.mxu0
    %1658 = vdwg.mxu0
    %v1660 = vsel %vm76, %v1421, 0
    %v1663 = vsel %vm76, %v1422, 0
    %1665 = vmatprep.subr.mxu0 0.0
    %1666 = vmatpush1.xpose.msra.mxu0 0.0
    %1667 = vmatprep.subr.mxu0 0.0
    %1668 = vmatpush1.xpose.msra.mxu0 0.0
    %1669 = vmatprep.subr.mxu0 0.0
    %1670 = vmatpush1.xpose.msra.mxu0 0.0
    %1671 = vmatprep.subr.mxu0 0.0
    %1672 = vmatpush1.xpose.msra.mxu0 0.0
    %1673 = vmatprep.subr.mxu0 0.0
    %1674 = vmatpush1.xpose.msra.mxu0 0.0
    %1675 = vmatprep.subr.mxu0 0.0
    %1676 = vmatpush1.xpose.msra.mxu0 0.0
    %1677 = vmatprep.subr.mxu0 0.0
    %1678 = vmatpush1.xpose.msra.mxu0 0.0
    %1679 = vmatprep.subr.mxu0 0.0
    %1680 = vmatpush1.xpose.msra.mxu0 0.0
    %1681 = vmatprep.subr.mxu0 0.0
    %1682 = vmatpush1.xpose.msra.mxu0 0.0
    %1683 = vmatprep.subr.mxu0 0.0
    %1684 = vmatpush1.xpose.msra.mxu0 0.0
    %1685 = vmatprep.subr.mxu0 0.0
    %1686 = vmatpush1.xpose.msra.mxu0 0.0
    %1687 = vmatprep.subr.mxu0 0.0
    %1688 = vmatpush1.xpose.msra.mxu0 0.0
    %1689 = vmatprep.subr.mxu0 0.0
    %1690 = vmatpush1.xpose.msra.mxu0 0.0
    %1691 = vmatprep.subr.mxu0 0.0
    %1692 = vmatpush1.xpose.msra.mxu0 0.0
    %1693 = vmatprep.subr.mxu0 0.0
    %1694 = vmatpush1.xpose.msra.mxu0 %v87
    %1695 = vmatprep.subr.mxu0 0.0
    %1696 = vmatpush1.xpose.msra.mxu0 %v84
    %1697 = vmatprep.subr.mxu0 0.0
    %1698 = vmatpush2.xpose.msra.mxu0 0.0
    %1699 = vmatprep.subr.mxu0 0.0
    %1700 = vmatpush2.xpose.msra.mxu0 0.0
    %1701 = vmatprep.subr.mxu0 0.0
    %1702 = vmatpush2.xpose.msra.mxu0 0.0
    %1703 = vmatprep.subr.mxu0 0.0
    %1704 = vmatpush2.xpose.msra.mxu0 0.0
    %1705 = vmatprep.subr.mxu0 0.0
    %1706 = vmatpush2.xpose.msra.mxu0 0.0
    %1707 = vmatprep.subr.mxu0 0.0
    %1708 = vmatpush2.xpose.msra.mxu0 0.0
    %1709 = vmatprep.subr.mxu0 0.0
    %1710 = vmatpush2.xpose.msra.mxu0 0.0
    %1711 = vmatprep.subr.mxu0 0.0
    %1712 = vmatpush2.xpose.msra.mxu0 0.0
    %1713 = vmatprep.subr.mxu0 0.0
    %1714 = vmatpush2.xpose.msra.mxu0 0.0
    %1715 = vmatprep.subr.mxu0 0.0
    %1716 = vmatpush2.xpose.msra.mxu0 0.0
    %1717 = vmatprep.subr.mxu0 0.0
    %1718 = vmatpush2.xpose.msra.mxu0 0.0
    %1719 = vmatprep.subr.mxu0 0.0
    %1720 = vmatpush2.xpose.msra.mxu0 0.0
    %1721 = vmatprep.subr.mxu0 0.0
    %1722 = vmatpush2.xpose.msra.mxu0 0.0
    %1723 = vmatprep.subr.mxu0 0.0
    %1724 = vmatpush2.xpose.msra.mxu0 0.0
    %1725 = vmatprep.subr.mxu0 0.0
    %1726 = vmatpush2.xpose.msra.mxu0 0.0
    %1727 = vmatprep.subr.mxu0 0.0
    %1728 = vmatpush2.xpose.msra.mxu0 0.0
    %1729 = vmatprep.mubr.f32.mxu0 0.0
    %1730 = vmatmul.mubr.f32.gmra.mxu0 %v1660
    %v1731 = vpop.f32.mrf.mxu0
    %v1732 = vadd.f32 0.0, %v1731
    %v1733 = vpop.f32.mrf.mxu0
    %1734 = vmatprep.mubr.f32.mxu0 0.0
    %1735 = vmatmul.mubr.f32.gmra.mxu0 %v1663
    %v1736 = vpop.f32.mrf.mxu0
    %v1737 = vadd.f32 0.0, %v1736
    %v1738 = vpop.f32.mrf.mxu0
    %1739 = vdwg.mxu0
    %v1741 = vsel %vm76, %v1423, 0
    %v1744 = vsel %vm76, %v1424, 0
    %1746 = vmatprep.subr.mxu0 0.0
    %1747 = vmatpush1.xpose.msra.mxu0 0.0
    %1748 = vmatprep.subr.mxu0 0.0
    %1749 = vmatpush1.xpose.msra.mxu0 0.0
    %1750 = vmatprep.subr.mxu0 0.0
    %1751 = vmatpush1.xpose.msra.mxu0 0.0
    %1752 = vmatprep.subr.mxu0 0.0
    %1753 = vmatpush1.xpose.msra.mxu0 0.0
    %1754 = vmatprep.subr.mxu0 0.0
    %1755 = vmatpush1.xpose.msra.mxu0 0.0
    %1756 = vmatprep.subr.mxu0 0.0
    %1757 = vmatpush1.xpose.msra.mxu0 0.0
    %1758 = vmatprep.subr.mxu0 0.0
    %1759 = vmatpush1.xpose.msra.mxu0 0.0
    %1760 = vmatprep.subr.mxu0 0.0
    %1761 = vmatpush1.xpose.msra.mxu0 0.0
    %1762 = vmatprep.subr.mxu0 0.0
    %1763 = vmatpush1.xpose.msra.mxu0 0.0
    %1764 = vmatprep.subr.mxu0 0.0
    %1765 = vmatpush1.xpose.msra.mxu0 0.0
    %1766 = vmatprep.subr.mxu0 0.0
    %1767 = vmatpush1.xpose.msra.mxu0 0.0
    %1768 = vmatprep.subr.mxu0 0.0
    %1769 = vmatpush1.xpose.msra.mxu0 0.0
    %1770 = vmatprep.subr.mxu0 0.0
    %1771 = vmatpush1.xpose.msra.mxu0 0.0
    %1772 = vmatprep.subr.mxu0 0.0
    %1773 = vmatpush1.xpose.msra.mxu0 0.0
    %1774 = vmatprep.subr.mxu0 0.0
    %1775 = vmatpush1.xpose.msra.mxu0 %v87
    %1776 = vmatprep.subr.mxu0 0.0
    %1777 = vmatpush1.xpose.msra.mxu0 %v84
    %1778 = vmatprep.subr.mxu0 0.0
    %1779 = vmatpush2.xpose.msra.mxu0 0.0
    %1780 = vmatprep.subr.mxu0 0.0
    %1781 = vmatpush2.xpose.msra.mxu0 0.0
    %1782 = vmatprep.subr.mxu0 0.0
    %1783 = vmatpush2.xpose.msra.mxu0 0.0
    %1784 = vmatprep.subr.mxu0 0.0
    %1785 = vmatpush2.xpose.msra.mxu0 0.0
    %1786 = vmatprep.subr.mxu0 0.0
    %1787 = vmatpush2.xpose.msra.mxu0 0.0
    %1788 = vmatprep.subr.mxu0 0.0
    %1789 = vmatpush2.xpose.msra.mxu0 0.0
    %1790 = vmatprep.subr.mxu0 0.0
    %1791 = vmatpush2.xpose.msra.mxu0 0.0
    %1792 = vmatprep.subr.mxu0 0.0
    %1793 = vmatpush2.xpose.msra.mxu0 0.0
    %1794 = vmatprep.subr.mxu0 0.0
    %1795 = vmatpush2.xpose.msra.mxu0 0.0
    %1796 = vmatprep.subr.mxu0 0.0
    %1797 = vmatpush2.xpose.msra.mxu0 0.0
    %1798 = vmatprep.subr.mxu0 0.0
    %1799 = vmatpush2.xpose.msra.mxu0 0.0
    %1800 = vmatprep.subr.mxu0 0.0
    %1801 = vmatpush2.xpose.msra.mxu0 0.0
    %1802 = vmatprep.subr.mxu0 0.0
    %1803 = vmatpush2.xpose.msra.mxu0 0.0
    %1804 = vmatprep.subr.mxu0 0.0
    %1805 = vmatpush2.xpose.msra.mxu0 0.0
    %1806 = vmatprep.subr.mxu0 0.0
    %1807 = vmatpush2.xpose.msra.mxu0 0.0
    %1808 = vmatprep.subr.mxu0 0.0
    %1809 = vmatpush2.xpose.msra.mxu0 0.0
    %1810 = vmatprep.mubr.f32.mxu0 0.0
    %1811 = vmatmul.mubr.f32.gmra.mxu0 %v1741
    %v1812 = vpop.f32.mrf.mxu0
    %v1813 = vadd.f32 0.0, %v1812
    %v1814 = vpop.f32.mrf.mxu0
    %1815 = vmatprep.mubr.f32.mxu0 0.0
    %1816 = vmatmul.mubr.f32.gmra.mxu0 %v1744
    %v1817 = vpop.f32.mrf.mxu0
    %v1818 = vadd.f32 0.0, %v1817
    %v1819 = vpop.f32.mrf.mxu0
    %1820 = vdwg.mxu0
    %v1822 = vsel %vm76, %v1425, 0
    %v1825 = vsel %vm76, %v1426, 0
    %1827 = vmatprep.subr.mxu0 0.0
    %1828 = vmatpush1.xpose.msra.mxu0 0.0
    %1829 = vmatprep.subr.mxu0 0.0
    %1830 = vmatpush1.xpose.msra.mxu0 0.0
    %1831 = vmatprep.subr.mxu0 0.0
    %1832 = vmatpush1.xpose.msra.mxu0 0.0
    %1833 = vmatprep.subr.mxu0 0.0
    %1834 = vmatpush1.xpose.msra.mxu0 0.0
    %1835 = vmatprep.subr.mxu0 0.0
    %1836 = vmatpush1.xpose.msra.mxu0 0.0
    %1837 = vmatprep.subr.mxu0 0.0
    %1838 = vmatpush1.xpose.msra.mxu0 0.0
    %1839 = vmatprep.subr.mxu0 0.0
    %1840 = vmatpush1.xpose.msra.mxu0 0.0
    %1841 = vmatprep.subr.mxu0 0.0
    %1842 = vmatpush1.xpose.msra.mxu0 0.0
    %1843 = vmatprep.subr.mxu0 0.0
    %1844 = vmatpush1.xpose.msra.mxu0 0.0
    %1845 = vmatprep.subr.mxu0 0.0
    %1846 = vmatpush1.xpose.msra.mxu0 0.0
    %1847 = vmatprep.subr.mxu0 0.0
    %1848 = vmatpush1.xpose.msra.mxu0 0.0
    %1849 = vmatprep.subr.mxu0 0.0
    %1850 = vmatpush1.xpose.msra.mxu0 0.0
    %1851 = vmatprep.subr.mxu0 0.0
    %1852 = vmatpush1.xpose.msra.mxu0 0.0
    %1853 = vmatprep.subr.mxu0 0.0
    %1854 = vmatpush1.xpose.msra.mxu0 0.0
    %1855 = vmatprep.subr.mxu0 0.0
    %1856 = vmatpush1.xpose.msra.mxu0 %v87
    %1857 = vmatprep.subr.mxu0 0.0
    %1858 = vmatpush1.xpose.msra.mxu0 %v84
    %1859 = vmatprep.subr.mxu0 0.0
    %1860 = vmatpush2.xpose.msra.mxu0 0.0
    %1861 = vmatprep.subr.mxu0 0.0
    %1862 = vmatpush2.xpose.msra.mxu0 0.0
    %1863 = vmatprep.subr.mxu0 0.0
    %1864 = vmatpush2.xpose.msra.mxu0 0.0
    %1865 = vmatprep.subr.mxu0 0.0
    %1866 = vmatpush2.xpose.msra.mxu0 0.0
    %1867 = vmatprep.subr.mxu0 0.0
    %1868 = vmatpush2.xpose.msra.mxu0 0.0
    %1869 = vmatprep.subr.mxu0 0.0
    %1870 = vmatpush2.xpose.msra.mxu0 0.0
    %1871 = vmatprep.subr.mxu0 0.0
    %1872 = vmatpush2.xpose.msra.mxu0 0.0
    %1873 = vmatprep.subr.mxu0 0.0
    %1874 = vmatpush2.xpose.msra.mxu0 0.0
    %1875 = vmatprep.subr.mxu0 0.0
    %1876 = vmatpush2.xpose.msra.mxu0 0.0
    %1877 = vmatprep.subr.mxu0 0.0
    %1878 = vmatpush2.xpose.msra.mxu0 0.0
    %1879 = vmatprep.subr.mxu0 0.0
    %1880 = vmatpush2.xpose.msra.mxu0 0.0
    %1881 = vmatprep.subr.mxu0 0.0
    %1882 = vmatpush2.xpose.msra.mxu0 0.0
    %1883 = vmatprep.subr.mxu0 0.0
    %1884 = vmatpush2.xpose.msra.mxu0 0.0
    %1885 = vmatprep.subr.mxu0 0.0
    %1886 = vmatpush2.xpose.msra.mxu0 0.0
    %1887 = vmatprep.subr.mxu0 0.0
    %1888 = vmatpush2.xpose.msra.mxu0 0.0
    %1889 = vmatprep.subr.mxu0 0.0
    %1890 = vmatpush2.xpose.msra.mxu0 0.0
    %1891 = vmatprep.mubr.f32.mxu0 0.0
    %1892 = vmatmul.mubr.f32.gmra.mxu0 %v1822
    %v1893 = vpop.f32.mrf.mxu0
    %v1894 = vadd.f32 0.0, %v1893
    %v1895 = vpop.f32.mrf.mxu0
    %1896 = vmatprep.mubr.f32.mxu0 0.0
    %1897 = vmatmul.mubr.f32.gmra.mxu0 %v1825
    %v1898 = vpop.f32.mrf.mxu0
    %v1899 = vadd.f32 0.0, %v1898
    %v1900 = vpop.f32.mrf.mxu0
    %1901 = vdwg.mxu0
    %v1903 = vsel %vm76, %v1427, 0
    %v1906 = vsel %vm76, %v1428, 0
    %1908 = vmatprep.subr.mxu0 0.0
    %1909 = vmatpush1.xpose.msra.mxu0 0.0
    %1910 = vmatprep.subr.mxu0 0.0
    %1911 = vmatpush1.xpose.msra.mxu0 0.0
    %1912 = vmatprep.subr.mxu0 0.0
    %1913 = vmatpush1.xpose.msra.mxu0 0.0
    %1914 = vmatprep.subr.mxu0 0.0
    %1915 = vmatpush1.xpose.msra.mxu0 0.0
    %1916 = vmatprep.subr.mxu0 0.0
    %1917 = vmatpush1.xpose.msra.mxu0 0.0
    %1918 = vmatprep.subr.mxu0 0.0
    %1919 = vmatpush1.xpose.msra.mxu0 0.0
    %1920 = vmatprep.subr.mxu0 0.0
    %1921 = vmatpush1.xpose.msra.mxu0 0.0
    %1922 = vmatprep.subr.mxu0 0.0
    %1923 = vmatpush1.xpose.msra.mxu0 0.0
    %1924 = vmatprep.subr.mxu0 0.0
    %1925 = vmatpush1.xpose.msra.mxu0 0.0
    %1926 = vmatprep.subr.mxu0 0.0
    %1927 = vmatpush1.xpose.msra.mxu0 0.0
    %1928 = vmatprep.subr.mxu0 0.0
    %1929 = vmatpush1.xpose.msra.mxu0 0.0
    %1930 = vmatprep.subr.mxu0 0.0
    %1931 = vmatpush1.xpose.msra.mxu0 0.0
    %1932 = vmatprep.subr.mxu0 0.0
    %1933 = vmatpush1.xpose.msra.mxu0 0.0
    %1934 = vmatprep.subr.mxu0 0.0
    %1935 = vmatpush1.xpose.msra.mxu0 0.0
    %1936 = vmatprep.subr.mxu0 0.0
    %1937 = vmatpush1.xpose.msra.mxu0 %v87
    %1938 = vmatprep.subr.mxu0 0.0
    %1939 = vmatpush1.xpose.msra.mxu0 %v84
    %1940 = vmatprep.subr.mxu0 0.0
    %1941 = vmatpush2.xpose.msra.mxu0 0.0
    %1942 = vmatprep.subr.mxu0 0.0
    %1943 = vmatpush2.xpose.msra.mxu0 0.0
    %1944 = vmatprep.subr.mxu0 0.0
    %1945 = vmatpush2.xpose.msra.mxu0 0.0
    %1946 = vmatprep.subr.mxu0 0.0
    %1947 = vmatpush2.xpose.msra.mxu0 0.0
    %1948 = vmatprep.subr.mxu0 0.0
    %1949 = vmatpush2.xpose.msra.mxu0 0.0
    %1950 = vmatprep.subr.mxu0 0.0
    %1951 = vmatpush2.xpose.msra.mxu0 0.0
    %1952 = vmatprep.subr.mxu0 0.0
    %1953 = vmatpush2.xpose.msra.mxu0 0.0
    %1954 = vmatprep.subr.mxu0 0.0
    %1955 = vmatpush2.xpose.msra.mxu0 0.0
    %1956 = vmatprep.subr.mxu0 0.0
    %1957 = vmatpush2.xpose.msra.mxu0 0.0
    %1958 = vmatprep.subr.mxu0 0.0
    %1959 = vmatpush2.xpose.msra.mxu0 0.0
    %1960 = vmatprep.subr.mxu0 0.0
    %1961 = vmatpush2.xpose.msra.mxu0 0.0
    %1962 = vmatprep.subr.mxu0 0.0
    %1963 = vmatpush2.xpose.msra.mxu0 0.0
    %1964 = vmatprep.subr.mxu0 0.0
    %1965 = vmatpush2.xpose.msra.mxu0 0.0
    %1966 = vmatprep.subr.mxu0 0.0
    %1967 = vmatpush2.xpose.msra.mxu0 0.0
    %1968 = vmatprep.subr.mxu0 0.0
    %1969 = vmatpush2.xpose.msra.mxu0 0.0
    %1970 = vmatprep.subr.mxu0 0.0
    %1971 = vmatpush2.xpose.msra.mxu0 0.0
    %1972 = vmatprep.mubr.f32.mxu0 0.0
    %1973 = vmatmul.mubr.f32.gmra.mxu0 %v1903
    %v1974 = vpop.f32.mrf.mxu0
    %v1975 = vadd.f32 0.0, %v1974
    %v1976 = vpop.f32.mrf.mxu0
    %1977 = vmatprep.mubr.f32.mxu0 0.0
    %1978 = vmatmul.mubr.f32.gmra.mxu0 %v1906
    %v1979 = vpop.f32.mrf.mxu0
    %v1980 = vadd.f32 0.0, %v1979
    %v1981 = vpop.f32.mrf.mxu0
    %1982 = vdwg.mxu0
    %v1984 = vsel %vm76, %v1429, 0
    %v1987 = vsel %vm76, %v1430, 0
    %1989 = vmatprep.subr.mxu0 0.0
    %1990 = vmatpush1.xpose.msra.mxu0 0.0
    %1991 = vmatprep.subr.mxu0 0.0
    %1992 = vmatpush1.xpose.msra.mxu0 0.0
    %1993 = vmatprep.subr.mxu0 0.0
    %1994 = vmatpush1.xpose.msra.mxu0 0.0
    %1995 = vmatprep.subr.mxu0 0.0
    %1996 = vmatpush1.xpose.msra.mxu0 0.0
    %1997 = vmatprep.subr.mxu0 0.0
    %1998 = vmatpush1.xpose.msra.mxu0 0.0
    %1999 = vmatprep.subr.mxu0 0.0
    %2000 = vmatpush1.xpose.msra.mxu0 0.0
    %2001 = vmatprep.subr.mxu0 0.0
    %2002 = vmatpush1.xpose.msra.mxu0 0.0
    %2003 = vmatprep.subr.mxu0 0.0
    %2004 = vmatpush1.xpose.msra.mxu0 0.0
    %2005 = vmatprep.subr.mxu0 0.0
    %2006 = vmatpush1.xpose.msra.mxu0 0.0
    %2007 = vmatprep.subr.mxu0 0.0
    %2008 = vmatpush1.xpose.msra.mxu0 0.0
    %2009 = vmatprep.subr.mxu0 0.0
    %2010 = vmatpush1.xpose.msra.mxu0 0.0
    %2011 = vmatprep.subr.mxu0 0.0
    %2012 = vmatpush1.xpose.msra.mxu0 0.0
    %2013 = vmatprep.subr.mxu0 0.0
    %2014 = vmatpush1.xpose.msra.mxu0 0.0
    %2015 = vmatprep.subr.mxu0 0.0
    %2016 = vmatpush1.xpose.msra.mxu0 0.0
    %2017 = vmatprep.subr.mxu0 0.0
    %2018 = vmatpush1.xpose.msra.mxu0 %v87
    %2019 = vmatprep.subr.mxu0 0.0
    %2020 = vmatpush1.xpose.msra.mxu0 %v84
    %2021 = vmatprep.subr.mxu0 0.0
    %2022 = vmatpush2.xpose.msra.mxu0 0.0
    %2023 = vmatprep.subr.mxu0 0.0
    %2024 = vmatpush2.xpose.msra.mxu0 0.0
    %2025 = vmatprep.subr.mxu0 0.0
    %2026 = vmatpush2.xpose.msra.mxu0 0.0
    %2027 = vmatprep.subr.mxu0 0.0
    %2028 = vmatpush2.xpose.msra.mxu0 0.0
    %2029 = vmatprep.subr.mxu0 0.0
    %2030 = vmatpush2.xpose.msra.mxu0 0.0
    %2031 = vmatprep.subr.mxu0 0.0
    %2032 = vmatpush2.xpose.msra.mxu0 0.0
    %2033 = vmatprep.subr.mxu0 0.0
    %2034 = vmatpush2.xpose.msra.mxu0 0.0
    %2035 = vmatprep.subr.mxu0 0.0
    %2036 = vmatpush2.xpose.msra.mxu0 0.0
    %2037 = vmatprep.subr.mxu0 0.0
    %2038 = vmatpush2.xpose.msra.mxu0 0.0
    %2039 = vmatprep.subr.mxu0 0.0
    %2040 = vmatpush2.xpose.msra.mxu0 0.0
    %2041 = vmatprep.subr.mxu0 0.0
    %2042 = vmatpush2.xpose.msra.mxu0 0.0
    %2043 = vmatprep.subr.mxu0 0.0
    %2044 = vmatpush2.xpose.msra.mxu0 0.0
    %2045 = vmatprep.subr.mxu0 0.0
    %2046 = vmatpush2.xpose.msra.mxu0 0.0
    %2047 = vmatprep.subr.mxu0 0.0
    %2048 = vmatpush2.xpose.msra.mxu0 0.0
    %2049 = vmatprep.subr.mxu0 0.0
    %2050 = vmatpush2.xpose.msra.mxu0 0.0
    %2051 = vmatprep.subr.mxu0 0.0
    %2052 = vmatpush2.xpose.msra.mxu0 0.0
    %2053 = vmatprep.mubr.f32.mxu0 0.0
    %2054 = vmatmul.mubr.f32.gmra.mxu0 %v1984
    %v2055 = vpop.f32.mrf.mxu0
    %v2056 = vadd.f32 0.0, %v2055
    %v2057 = vpop.f32.mrf.mxu0
    %2058 = vmatprep.mubr.f32.mxu0 0.0
    %2059 = vmatmul.mubr.f32.gmra.mxu0 %v1987
    %v2060 = vpop.f32.mrf.mxu0
    %v2061 = vadd.f32 0.0, %v2060
    %v2062 = vpop.f32.mrf.mxu0
    %2063 = vdwg.mxu0
    %v2065 = vsel %vm76, %v1431, 0
    %v2068 = vsel %vm76, %v1432, 0
    %2070 = vmatprep.subr.mxu0 0.0
    %2071 = vmatpush1.xpose.msra.mxu0 0.0
    %2072 = vmatprep.subr.mxu0 0.0
    %2073 = vmatpush1.xpose.msra.mxu0 0.0
    %2074 = vmatprep.subr.mxu0 0.0
    %2075 = vmatpush1.xpose.msra.mxu0 0.0
    %2076 = vmatprep.subr.mxu0 0.0
    %2077 = vmatpush1.xpose.msra.mxu0 0.0
    %2078 = vmatprep.subr.mxu0 0.0
    %2079 = vmatpush1.xpose.msra.mxu0 0.0
    %2080 = vmatprep.subr.mxu0 0.0
    %2081 = vmatpush1.xpose.msra.mxu0 0.0
    %2082 = vmatprep.subr.mxu0 0.0
    %2083 = vmatpush1.xpose.msra.mxu0 0.0
    %2084 = vmatprep.subr.mxu0 0.0
    %2085 = vmatpush1.xpose.msra.mxu0 0.0
    %2086 = vmatprep.subr.mxu0 0.0
    %2087 = vmatpush1.xpose.msra.mxu0 0.0
    %2088 = vmatprep.subr.mxu0 0.0
    %2089 = vmatpush1.xpose.msra.mxu0 0.0
    %2090 = vmatprep.subr.mxu0 0.0
    %2091 = vmatpush1.xpose.msra.mxu0 0.0
    %2092 = vmatprep.subr.mxu0 0.0
    %2093 = vmatpush1.xpose.msra.mxu0 0.0
    %2094 = vmatprep.subr.mxu0 0.0
    %2095 = vmatpush1.xpose.msra.mxu0 0.0
    %2096 = vmatprep.subr.mxu0 0.0
    %2097 = vmatpush1.xpose.msra.mxu0 0.0
    %2098 = vmatprep.subr.mxu0 0.0
    %2099 = vmatpush1.xpose.msra.mxu0 %v87
    %2100 = vmatprep.subr.mxu0 0.0
    %2101 = vmatpush1.xpose.msra.mxu0 %v84
    %2102 = vmatprep.subr.mxu0 0.0
    %2103 = vmatpush2.xpose.msra.mxu0 0.0
    %2104 = vmatprep.subr.mxu0 0.0
    %2105 = vmatpush2.xpose.msra.mxu0 0.0
    %2106 = vmatprep.subr.mxu0 0.0
    %2107 = vmatpush2.xpose.msra.mxu0 0.0
    %2108 = vmatprep.subr.mxu0 0.0
    %2109 = vmatpush2.xpose.msra.mxu0 0.0
    %2110 = vmatprep.subr.mxu0 0.0
    %2111 = vmatpush2.xpose.msra.mxu0 0.0
    %2112 = vmatprep.subr.mxu0 0.0
    %2113 = vmatpush2.xpose.msra.mxu0 0.0
    %2114 = vmatprep.subr.mxu0 0.0
    %2115 = vmatpush2.xpose.msra.mxu0 0.0
    %2116 = vmatprep.subr.mxu0 0.0
    %2117 = vmatpush2.xpose.msra.mxu0 0.0
    %2118 = vmatprep.subr.mxu0 0.0
    %2119 = vmatpush2.xpose.msra.mxu0 0.0
    %2120 = vmatprep.subr.mxu0 0.0
    %2121 = vmatpush2.xpose.msra.mxu0 0.0
    %2122 = vmatprep.subr.mxu0 0.0
    %2123 = vmatpush2.xpose.msra.mxu0 0.0
    %2124 = vmatprep.subr.mxu0 0.0
    %2125 = vmatpush2.xpose.msra.mxu0 0.0
    %2126 = vmatprep.subr.mxu0 0.0
    %2127 = vmatpush2.xpose.msra.mxu0 0.0
    %2128 = vmatprep.subr.mxu0 0.0
    %2129 = vmatpush2.xpose.msra.mxu0 0.0
    %2130 = vmatprep.subr.mxu0 0.0
    %2131 = vmatpush2.xpose.msra.mxu0 0.0
    %2132 = vmatprep.subr.mxu0 0.0
    %2133 = vmatpush2.xpose.msra.mxu0 0.0
    %2134 = vmatprep.mubr.f32.mxu0 0.0
    %2135 = vmatmul.mubr.f32.gmra.mxu0 %v2065
    %v2136 = vpop.f32.mrf.mxu0
    %v2137 = vadd.f32 0.0, %v2136
    %v2138 = vpop.f32.mrf.mxu0
    %2139 = vmatprep.mubr.f32.mxu0 0.0
    %2140 = vmatmul.mubr.f32.gmra.mxu0 %v2068
    %v2141 = vpop.f32.mrf.mxu0
    %v2142 = vadd.f32 0.0, %v2141
    %v2143 = vpop.f32.mrf.mxu0
    %2144 = vdwg.mxu0
    %2145 = vmatprep.subr.mxu0 0.0
    %2146 = vmatpush1.msra.mxu0 0.0
    %2147 = vmatprep.subr.mxu0 0.0
    %2148 = vmatpush1.msra.mxu0 0.0
    %2149 = vmatprep.subr.mxu0 0.0
    %2150 = vmatpush1.msra.mxu0 0.0
    %2151 = vmatprep.subr.mxu0 0.0
    %2152 = vmatpush1.msra.mxu0 0.0
    %2153 = vmatprep.subr.mxu0 0.0
    %2154 = vmatpush1.msra.mxu0 0.0
    %2155 = vmatprep.subr.mxu0 0.0
    %2156 = vmatpush1.msra.mxu0 0.0
    %2157 = vmatprep.subr.mxu0 0.0
    %2158 = vmatpush1.msra.mxu0 0.0
    %2159 = vmatprep.subr.mxu0 0.0
    %2160 = vmatpush1.msra.mxu0 0.0
    %2161 = vmatprep.subr.mxu0 0.0
    %2162 = vmatpush1.msra.mxu0 0.0
    %2163 = vmatprep.subr.mxu0 0.0
    %2164 = vmatpush1.msra.mxu0 0.0
    %2165 = vmatprep.subr.mxu0 0.0
    %2166 = vmatpush1.msra.mxu0 0.0
    %2167 = vmatprep.subr.mxu0 0.0
    %2168 = vmatpush1.msra.mxu0 0.0
    %2169 = vmatprep.subr.mxu0 0.0
    %2170 = vmatpush1.msra.mxu0 0.0
    %2171 = vmatprep.subr.mxu0 0.0
    %2172 = vmatpush1.msra.mxu0 0.0
    %2173 = vmatprep.subr.mxu0 0.0
    %2174 = vmatpush1.msra.mxu0 %v1575
    %2175 = vmatprep.subr.mxu0 0.0
    %2176 = vmatpush1.msra.mxu0 %v1570
    %2177 = vmatprep.subr.mxu0 0.0
    %2178 = vmatpush2.msra.mxu0 0.0
    %2179 = vmatprep.subr.mxu0 0.0
    %2180 = vmatpush2.msra.mxu0 0.0
    %2181 = vmatprep.subr.mxu0 0.0
    %2182 = vmatpush2.msra.mxu0 0.0
    %2183 = vmatprep.subr.mxu0 0.0
    %2184 = vmatpush2.msra.mxu0 0.0
    %2185 = vmatprep.subr.mxu0 0.0
    %2186 = vmatpush2.msra.mxu0 0.0
    %2187 = vmatprep.subr.mxu0 0.0
    %2188 = vmatpush2.msra.mxu0 0.0
    %2189 = vmatprep.subr.mxu0 0.0
    %2190 = vmatpush2.msra.mxu0 0.0
    %2191 = vmatprep.subr.mxu0 0.0
    %2192 = vmatpush2.msra.mxu0 0.0
    %2193 = vmatprep.subr.mxu0 0.0
    %2194 = vmatpush2.msra.mxu0 0.0
    %2195 = vmatprep.subr.mxu0 0.0
    %2196 = vmatpush2.msra.mxu0 0.0
    %2197 = vmatprep.subr.mxu0 0.0
    %2198 = vmatpush2.msra.mxu0 0.0
    %2199 = vmatprep.subr.mxu0 0.0
    %2200 = vmatpush2.msra.mxu0 0.0
    %2201 = vmatprep.subr.mxu0 0.0
    %2202 = vmatpush2.msra.mxu0 0.0
    %2203 = vmatprep.subr.mxu0 0.0
    %2204 = vmatpush2.msra.mxu0 0.0
    %2205 = vmatprep.subr.mxu0 0.0
    %2206 = vmatpush2.msra.mxu0 0.0
    %2207 = vmatprep.subr.mxu0 0.0
    %2208 = vmatpush2.msra.mxu0 0.0
    %2209 = vmatprep.mubr.f32.mxu0 0.0
    %2210 = vmatmul.mubr.f32.gmra.mxu0 %v732
    %v2211 = vpop.f32.mrf.mxu0
    %v2212 = vadd.f32 0.0, %v2211
    %v2213 = vpop.f32.mrf.mxu0
    %2214 = vmatprep.mubr.f32.mxu0 0.0
    %2215 = vmatmul.mubr.f32.gmra.mxu0 %v735
    %v2216 = vpop.f32.mrf.mxu0
    %v2217 = vadd.f32 0.0, %v2216
    %v2218 = vpop.f32.mrf.mxu0
    %2219 = vdwg.mxu0
    %2220 = vmatprep.subr.mxu0 0.0
    %2221 = vmatpush1.msra.mxu0 0.0
    %2222 = vmatprep.subr.mxu0 0.0
    %2223 = vmatpush1.msra.mxu0 0.0
    %2224 = vmatprep.subr.mxu0 0.0
    %2225 = vmatpush1.msra.mxu0 0.0
    %2226 = vmatprep.subr.mxu0 0.0
    %2227 = vmatpush1.msra.mxu0 0.0
    %2228 = vmatprep.subr.mxu0 0.0
    %2229 = vmatpush1.msra.mxu0 0.0
    %2230 = vmatprep.subr.mxu0 0.0
    %2231 = vmatpush1.msra.mxu0 0.0
    %2232 = vmatprep.subr.mxu0 0.0
    %2233 = vmatpush1.msra.mxu0 0.0
    %2234 = vmatprep.subr.mxu0 0.0
    %2235 = vmatpush1.msra.mxu0 0.0
    %2236 = vmatprep.subr.mxu0 0.0
    %2237 = vmatpush1.msra.mxu0 0.0
    %2238 = vmatprep.subr.mxu0 0.0
    %2239 = vmatpush1.msra.mxu0 0.0
    %2240 = vmatprep.subr.mxu0 0.0
    %2241 = vmatpush1.msra.mxu0 0.0
    %2242 = vmatprep.subr.mxu0 0.0
    %2243 = vmatpush1.msra.mxu0 0.0
    %2244 = vmatprep.subr.mxu0 0.0
    %2245 = vmatpush1.msra.mxu0 0.0
    %2246 = vmatprep.subr.mxu0 0.0
    %2247 = vmatpush1.msra.mxu0 0.0
    %2248 = vmatprep.subr.mxu0 0.0
    %2249 = vmatpush1.msra.mxu0 %v1656
    %2250 = vmatprep.subr.mxu0 0.0
    %2251 = vmatpush1.msra.mxu0 %v1651
    %2252 = vmatprep.subr.mxu0 0.0
    %2253 = vmatpush2.msra.mxu0 0.0
    %2254 = vmatprep.subr.mxu0 0.0
    %2255 = vmatpush2.msra.mxu0 0.0
    %2256 = vmatprep.subr.mxu0 0.0
    %2257 = vmatpush2.msra.mxu0 0.0
    %2258 = vmatprep.subr.mxu0 0.0
    %2259 = vmatpush2.msra.mxu0 0.0
    %2260 = vmatprep.subr.mxu0 0.0
    %2261 = vmatpush2.msra.mxu0 0.0
    %2262 = vmatprep.subr.mxu0 0.0
    %2263 = vmatpush2.msra.mxu0 0.0
    %2264 = vmatprep.subr.mxu0 0.0
    %2265 = vmatpush2.msra.mxu0 0.0
    %2266 = vmatprep.subr.mxu0 0.0
    %2267 = vmatpush2.msra.mxu0 0.0
    %2268 = vmatprep.subr.mxu0 0.0
    %2269 = vmatpush2.msra.mxu0 0.0
    %2270 = vmatprep.subr.mxu0 0.0
    %2271 = vmatpush2.msra.mxu0 0.0
    %2272 = vmatprep.subr.mxu0 0.0
    %2273 = vmatpush2.msra.mxu0 0.0
    %2274 = vmatprep.subr.mxu0 0.0
    %2275 = vmatpush2.msra.mxu0 0.0
    %2276 = vmatprep.subr.mxu0 0.0
    %2277 = vmatpush2.msra.mxu0 0.0
    %2278 = vmatprep.subr.mxu0 0.0
    %2279 = vmatpush2.msra.mxu0 0.0
    %2280 = vmatprep.subr.mxu0 0.0
    %2281 = vmatpush2.msra.mxu0 0.0
    %2282 = vmatprep.subr.mxu0 0.0
    %2283 = vmatpush2.msra.mxu0 0.0
    %2284 = vmatprep.mubr.f32.mxu0 0.0
    %2285 = vmatmul.mubr.f32.gmra.mxu0 %v732
    %v2286 = vpop.f32.mrf.mxu0
    %v2287 = vadd.f32 0.0, %v2286
    %v2288 = vpop.f32.mrf.mxu0
    %2289 = vmatprep.mubr.f32.mxu0 0.0
    %2290 = vmatmul.mubr.f32.gmra.mxu0 %v735
    %v2291 = vpop.f32.mrf.mxu0
    %v2292 = vadd.f32 0.0, %v2291
    %v2293 = vpop.f32.mrf.mxu0
    %2294 = vdwg.mxu0
    %2295 = vmatprep.subr.mxu0 0.0
    %2296 = vmatpush1.msra.mxu0 0.0
    %2297 = vmatprep.subr.mxu0 0.0
    %2298 = vmatpush1.msra.mxu0 0.0
    %2299 = vmatprep.subr.mxu0 0.0
    %2300 = vmatpush1.msra.mxu0 0.0
    %2301 = vmatprep.subr.mxu0 0.0
    %2302 = vmatpush1.msra.mxu0 0.0
    %2303 = vmatprep.subr.mxu0 0.0
    %2304 = vmatpush1.msra.mxu0 0.0
    %2305 = vmatprep.subr.mxu0 0.0
    %2306 = vmatpush1.msra.mxu0 0.0
    %2307 = vmatprep.subr.mxu0 0.0
    %2308 = vmatpush1.msra.mxu0 0.0
    %2309 = vmatprep.subr.mxu0 0.0
    %2310 = vmatpush1.msra.mxu0 0.0
    %2311 = vmatprep.subr.mxu0 0.0
    %2312 = vmatpush1.msra.mxu0 0.0
    %2313 = vmatprep.subr.mxu0 0.0
    %2314 = vmatpush1.msra.mxu0 0.0
    %2315 = vmatprep.subr.mxu0 0.0
    %2316 = vmatpush1.msra.mxu0 0.0
    %2317 = vmatprep.subr.mxu0 0.0
    %2318 = vmatpush1.msra.mxu0 0.0
    %2319 = vmatprep.subr.mxu0 0.0
    %2320 = vmatpush1.msra.mxu0 0.0
    %2321 = vmatprep.subr.mxu0 0.0
    %2322 = vmatpush1.msra.mxu0 0.0
    %2323 = vmatprep.subr.mxu0 0.0
    %2324 = vmatpush1.msra.mxu0 %v1737
    %2325 = vmatprep.subr.mxu0 0.0
    %2326 = vmatpush1.msra.mxu0 %v1732
    %2327 = vmatprep.subr.mxu0 0.0
    %2328 = vmatpush2.msra.mxu0 0.0
    %2329 = vmatprep.subr.mxu0 0.0
    %2330 = vmatpush2.msra.mxu0 0.0
    %2331 = vmatprep.subr.mxu0 0.0
    %2332 = vmatpush2.msra.mxu0 0.0
    %2333 = vmatprep.subr.mxu0 0.0
    %2334 = vmatpush2.msra.mxu0 0.0
    %2335 = vmatprep.subr.mxu0 0.0
    %2336 = vmatpush2.msra.mxu0 0.0
    %2337 = vmatprep.subr.mxu0 0.0
    %2338 = vmatpush2.msra.mxu0 0.0
    %2339 = vmatprep.subr.mxu0 0.0
    %2340 = vmatpush2.msra.mxu0 0.0
    %2341 = vmatprep.subr.mxu0 0.0
    %2342 = vmatpush2.msra.mxu0 0.0
    %2343 = vmatprep.subr.mxu0 0.0
    %2344 = vmatpush2.msra.mxu0 0.0
    %2345 = vmatprep.subr.mxu0 0.0
    %2346 = vmatpush2.msra.mxu0 0.0
    %2347 = vmatprep.subr.mxu0 0.0
    %2348 = vmatpush2.msra.mxu0 0.0
    %2349 = vmatprep.subr.mxu0 0.0
    %2350 = vmatpush2.msra.mxu0 0.0
    %2351 = vmatprep.subr.mxu0 0.0
    %2352 = vmatpush2.msra.mxu0 0.0
    %2353 = vmatprep.subr.mxu0 0.0
    %2354 = vmatpush2.msra.mxu0 0.0
    %2355 = vmatprep.subr.mxu0 0.0
    %2356 = vmatpush2.msra.mxu0 0.0
    %2357 = vmatprep.subr.mxu0 0.0
    %2358 = vmatpush2.msra.mxu0 0.0
    %2359 = vmatprep.mubr.f32.mxu0 0.0
    %2360 = vmatmul.mubr.f32.gmra.mxu0 %v732
    %v2361 = vpop.f32.mrf.mxu0
    %v2362 = vadd.f32 0.0, %v2361
    %v2363 = vpop.f32.mrf.mxu0
    %2364 = vmatprep.mubr.f32.mxu0 0.0
    %2365 = vmatmul.mubr.f32.gmra.mxu0 %v735
    %v2366 = vpop.f32.mrf.mxu0
    %v2367 = vadd.f32 0.0, %v2366
    %v2368 = vpop.f32.mrf.mxu0
    %2369 = vdwg.mxu0
    %2370 = vmatprep.subr.mxu0 0.0
    %2371 = vmatpush1.msra.mxu0 0.0
    %2372 = vmatprep.subr.mxu0 0.0
    %2373 = vmatpush1.msra.mxu0 0.0
    %2374 = vmatprep.subr.mxu0 0.0
    %2375 = vmatpush1.msra.mxu0 0.0
    %2376 = vmatprep.subr.mxu0 0.0
    %2377 = vmatpush1.msra.mxu0 0.0
    %2378 = vmatprep.subr.mxu0 0.0
    %2379 = vmatpush1.msra.mxu0 0.0
    %2380 = vmatprep.subr.mxu0 0.0
    %2381 = vmatpush1.msra.mxu0 0.0
    %2382 = vmatprep.subr.mxu0 0.0
    %2383 = vmatpush1.msra.mxu0 0.0
    %2384 = vmatprep.subr.mxu0 0.0
    %2385 = vmatpush1.msra.mxu0 0.0
    %2386 = vmatprep.subr.mxu0 0.0
    %2387 = vmatpush1.msra.mxu0 0.0
    %2388 = vmatprep.subr.mxu0 0.0
    %2389 = vmatpush1.msra.mxu0 0.0
    %2390 = vmatprep.subr.mxu0 0.0
    %2391 = vmatpush1.msra.mxu0 0.0
    %2392 = vmatprep.subr.mxu0 0.0
    %2393 = vmatpush1.msra.mxu0 0.0
    %2394 = vmatprep.subr.mxu0 0.0
    %2395 = vmatpush1.msra.mxu0 0.0
    %2396 = vmatprep.subr.mxu0 0.0
    %2397 = vmatpush1.msra.mxu0 0.0
    %2398 = vmatprep.subr.mxu0 0.0
    %2399 = vmatpush1.msra.mxu0 %v1818
    %2400 = vmatprep.subr.mxu0 0.0
    %2401 = vmatpush1.msra.mxu0 %v1813
    %2402 = vmatprep.subr.mxu0 0.0
    %2403 = vmatpush2.msra.mxu0 0.0
    %2404 = vmatprep.subr.mxu0 0.0
    %2405 = vmatpush2.msra.mxu0 0.0
    %2406 = vmatprep.subr.mxu0 0.0
    %2407 = vmatpush2.msra.mxu0 0.0
    %2408 = vmatprep.subr.mxu0 0.0
    %2409 = vmatpush2.msra.mxu0 0.0
    %2410 = vmatprep.subr.mxu0 0.0
    %2411 = vmatpush2.msra.mxu0 0.0
    %2412 = vmatprep.subr.mxu0 0.0
    %2413 = vmatpush2.msra.mxu0 0.0
    %2414 = vmatprep.subr.mxu0 0.0
    %2415 = vmatpush2.msra.mxu0 0.0
    %2416 = vmatprep.subr.mxu0 0.0
    %2417 = vmatpush2.msra.mxu0 0.0
    %2418 = vmatprep.subr.mxu0 0.0
    %2419 = vmatpush2.msra.mxu0 0.0
    %2420 = vmatprep.subr.mxu0 0.0
    %2421 = vmatpush2.msra.mxu0 0.0
    %2422 = vmatprep.subr.mxu0 0.0
    %2423 = vmatpush2.msra.mxu0 0.0
    %2424 = vmatprep.subr.mxu0 0.0
    %2425 = vmatpush2.msra.mxu0 0.0
    %2426 = vmatprep.subr.mxu0 0.0
    %2427 = vmatpush2.msra.mxu0 0.0
    %2428 = vmatprep.subr.mxu0 0.0
    %2429 = vmatpush2.msra.mxu0 0.0
    %2430 = vmatprep.subr.mxu0 0.0
    %2431 = vmatpush2.msra.mxu0 0.0
    %2432 = vmatprep.subr.mxu0 0.0
    %2433 = vmatpush2.msra.mxu0 0.0
    %2434 = vmatprep.mubr.f32.mxu0 0.0
    %2435 = vmatmul.mubr.f32.gmra.mxu0 %v732
    %v2436 = vpop.f32.mrf.mxu0
    %v2437 = vadd.f32 0.0, %v2436
    %v2438 = vpop.f32.mrf.mxu0
    %2439 = vmatprep.mubr.f32.mxu0 0.0
    %2440 = vmatmul.mubr.f32.gmra.mxu0 %v735
    %v2441 = vpop.f32.mrf.mxu0
    %v2442 = vadd.f32 0.0, %v2441
    %v2443 = vpop.f32.mrf.mxu0
    %2444 = vdwg.mxu0
    %2445 = vmatprep.subr.mxu0 0.0
    %2446 = vmatpush1.msra.mxu0 0.0
    %2447 = vmatprep.subr.mxu0 0.0
    %2448 = vmatpush1.msra.mxu0 0.0
    %2449 = vmatprep.subr.mxu0 0.0
    %2450 = vmatpush1.msra.mxu0 0.0
    %2451 = vmatprep.subr.mxu0 0.0
    %2452 = vmatpush1.msra.mxu0 0.0
    %2453 = vmatprep.subr.mxu0 0.0
    %2454 = vmatpush1.msra.mxu0 0.0
    %2455 = vmatprep.subr.mxu0 0.0
    %2456 = vmatpush1.msra.mxu0 0.0
    %2457 = vmatprep.subr.mxu0 0.0
    %2458 = vmatpush1.msra.mxu0 0.0
    %2459 = vmatprep.subr.mxu0 0.0
    %2460 = vmatpush1.msra.mxu0 0.0
    %2461 = vmatprep.subr.mxu0 0.0
    %2462 = vmatpush1.msra.mxu0 0.0
    %2463 = vmatprep.subr.mxu0 0.0
    %2464 = vmatpush1.msra.mxu0 0.0
    %2465 = vmatprep.subr.mxu0 0.0
    %2466 = vmatpush1.msra.mxu0 0.0
    %2467 = vmatprep.subr.mxu0 0.0
    %2468 = vmatpush1.msra.mxu0 0.0
    %2469 = vmatprep.subr.mxu0 0.0
    %2470 = vmatpush1.msra.mxu0 0.0
    %2471 = vmatprep.subr.mxu0 0.0
    %2472 = vmatpush1.msra.mxu0 0.0
    %2473 = vmatprep.subr.mxu0 0.0
    %2474 = vmatpush1.msra.mxu0 %v1899
    %2475 = vmatprep.subr.mxu0 0.0
    %2476 = vmatpush1.msra.mxu0 %v1894
    %2477 = vmatprep.subr.mxu0 0.0
    %2478 = vmatpush2.msra.mxu0 0.0
    %2479 = vmatprep.subr.mxu0 0.0
    %2480 = vmatpush2.msra.mxu0 0.0
    %2481 = vmatprep.subr.mxu0 0.0
    %2482 = vmatpush2.msra.mxu0 0.0
    %2483 = vmatprep.subr.mxu0 0.0
    %2484 = vmatpush2.msra.mxu0 0.0
    %2485 = vmatprep.subr.mxu0 0.0
    %2486 = vmatpush2.msra.mxu0 0.0
    %2487 = vmatprep.subr.mxu0 0.0
    %2488 = vmatpush2.msra.mxu0 0.0
    %2489 = vmatprep.subr.mxu0 0.0
    %2490 = vmatpush2.msra.mxu0 0.0
    %2491 = vmatprep.subr.mxu0 0.0
    %2492 = vmatpush2.msra.mxu0 0.0
    %2493 = vmatprep.subr.mxu0 0.0
    %2494 = vmatpush2.msra.mxu0 0.0
    %2495 = vmatprep.subr.mxu0 0.0
    %2496 = vmatpush2.msra.mxu0 0.0
    %2497 = vmatprep.subr.mxu0 0.0
    %2498 = vmatpush2.msra.mxu0 0.0
    %2499 = vmatprep.subr.mxu0 0.0
    %2500 = vmatpush2.msra.mxu0 0.0
    %2501 = vmatprep.subr.mxu0 0.0
    %2502 = vmatpush2.msra.mxu0 0.0
    %2503 = vmatprep.subr.mxu0 0.0
    %2504 = vmatpush2.msra.mxu0 0.0
    %2505 = vmatprep.subr.mxu0 0.0
    %2506 = vmatpush2.msra.mxu0 0.0
    %2507 = vmatprep.subr.mxu0 0.0
    %2508 = vmatpush2.msra.mxu0 0.0
    %2509 = vmatprep.mubr.f32.mxu0 0.0
    %2510 = vmatmul.mubr.f32.gmra.mxu0 %v732
    %v2511 = vpop.f32.mrf.mxu0
    %v2512 = vadd.f32 0.0, %v2511
    %v2513 = vpop.f32.mrf.mxu0
    %2514 = vmatprep.mubr.f32.mxu0 0.0
    %2515 = vmatmul.mubr.f32.gmra.mxu0 %v735
    %v2516 = vpop.f32.mrf.mxu0
    %v2517 = vadd.f32 0.0, %v2516
    %v2518 = vpop.f32.mrf.mxu0
    %2519 = vdwg.mxu0
    %2520 = vmatprep.subr.mxu0 0.0
    %2521 = vmatpush1.msra.mxu0 0.0
    %2522 = vmatprep.subr.mxu0 0.0
    %2523 = vmatpush1.msra.mxu0 0.0
    %2524 = vmatprep.subr.mxu0 0.0
    %2525 = vmatpush1.msra.mxu0 0.0
    %2526 = vmatprep.subr.mxu0 0.0
    %2527 = vmatpush1.msra.mxu0 0.0
    %2528 = vmatprep.subr.mxu0 0.0
    %2529 = vmatpush1.msra.mxu0 0.0
    %2530 = vmatprep.subr.mxu0 0.0
    %2531 = vmatpush1.msra.mxu0 0.0
    %2532 = vmatprep.subr.mxu0 0.0
    %2533 = vmatpush1.msra.mxu0 0.0
    %2534 = vmatprep.subr.mxu0 0.0
    %2535 = vmatpush1.msra.mxu0 0.0
    %2536 = vmatprep.subr.mxu0 0.0
    %2537 = vmatpush1.msra.mxu0 0.0
    %2538 = vmatprep.subr.mxu0 0.0
    %2539 = vmatpush1.msra.mxu0 0.0
    %2540 = vmatprep.subr.mxu0 0.0
    %2541 = vmatpush1.msra.mxu0 0.0
    %2542 = vmatprep.subr.mxu0 0.0
    %2543 = vmatpush1.msra.mxu0 0.0
    %2544 = vmatprep.subr.mxu0 0.0
    %2545 = vmatpush1.msra.mxu0 0.0
    %2546 = vmatprep.subr.mxu0 0.0
    %2547 = vmatpush1.msra.mxu0 0.0
    %2548 = vmatprep.subr.mxu0 0.0
    %2549 = vmatpush1.msra.mxu0 %v1980
    %2550 = vmatprep.subr.mxu0 0.0
    %2551 = vmatpush1.msra.mxu0 %v1975
    %2552 = vmatprep.subr.mxu0 0.0
    %2553 = vmatpush2.msra.mxu0 0.0
    %2554 = vmatprep.subr.mxu0 0.0
    %2555 = vmatpush2.msra.mxu0 0.0
    %2556 = vmatprep.subr.mxu0 0.0
    %2557 = vmatpush2.msra.mxu0 0.0
    %2558 = vmatprep.subr.mxu0 0.0
    %2559 = vmatpush2.msra.mxu0 0.0
    %2560 = vmatprep.subr.mxu0 0.0
    %2561 = vmatpush2.msra.mxu0 0.0
    %2562 = vmatprep.subr.mxu0 0.0
    %2563 = vmatpush2.msra.mxu0 0.0
    %2564 = vmatprep.subr.mxu0 0.0
    %2565 = vmatpush2.msra.mxu0 0.0
    %2566 = vmatprep.subr.mxu0 0.0
    %2567 = vmatpush2.msra.mxu0 0.0
    %2568 = vmatprep.subr.mxu0 0.0
    %2569 = vmatpush2.msra.mxu0 0.0
    %2570 = vmatprep.subr.mxu0 0.0
    %2571 = vmatpush2.msra.mxu0 0.0
    %2572 = vmatprep.subr.mxu0 0.0
    %2573 = vmatpush2.msra.mxu0 0.0
    %2574 = vmatprep.subr.mxu0 0.0
    %2575 = vmatpush2.msra.mxu0 0.0
    %2576 = vmatprep.subr.mxu0 0.0
    %2577 = vmatpush2.msra.mxu0 0.0
    %2578 = vmatprep.subr.mxu0 0.0
    %2579 = vmatpush2.msra.mxu0 0.0
    %2580 = vmatprep.subr.mxu0 0.0
    %2581 = vmatpush2.msra.mxu0 0.0
    %2582 = vmatprep.subr.mxu0 0.0
    %2583 = vmatpush2.msra.mxu0 0.0
    %2584 = vmatprep.mubr.f32.mxu0 0.0
    %2585 = vmatmul.mubr.f32.gmra.mxu0 %v732
    %v2586 = vpop.f32.mrf.mxu0
    %v2587 = vadd.f32 0.0, %v2586
    %v2588 = vpop.f32.mrf.mxu0
    %2589 = vmatprep.mubr.f32.mxu0 0.0
    %2590 = vmatmul.mubr.f32.gmra.mxu0 %v735
    %v2591 = vpop.f32.mrf.mxu0
    %v2592 = vadd.f32 0.0, %v2591
    %v2593 = vpop.f32.mrf.mxu0
    %2594 = vdwg.mxu0
    %2595 = vmatprep.subr.mxu0 0.0
    %2596 = vmatpush1.msra.mxu0 0.0
    %2597 = vmatprep.subr.mxu0 0.0
    %2598 = vmatpush1.msra.mxu0 0.0
    %2599 = vmatprep.subr.mxu0 0.0
    %2600 = vmatpush1.msra.mxu0 0.0
    %2601 = vmatprep.subr.mxu0 0.0
    %2602 = vmatpush1.msra.mxu0 0.0
    %2603 = vmatprep.subr.mxu0 0.0
    %2604 = vmatpush1.msra.mxu0 0.0
    %2605 = vmatprep.subr.mxu0 0.0
    %2606 = vmatpush1.msra.mxu0 0.0
    %2607 = vmatprep.subr.mxu0 0.0
    %2608 = vmatpush1.msra.mxu0 0.0
    %2609 = vmatprep.subr.mxu0 0.0
    %2610 = vmatpush1.msra.mxu0 0.0
    %2611 = vmatprep.subr.mxu0 0.0
    %2612 = vmatpush1.msra.mxu0 0.0
    %2613 = vmatprep.subr.mxu0 0.0
    %2614 = vmatpush1.msra.mxu0 0.0
    %2615 = vmatprep.subr.mxu0 0.0
    %2616 = vmatpush1.msra.mxu0 0.0
    %2617 = vmatprep.subr.mxu0 0.0
    %2618 = vmatpush1.msra.mxu0 0.0
    %2619 = vmatprep.subr.mxu0 0.0
    %2620 = vmatpush1.msra.mxu0 0.0
    %2621 = vmatprep.subr.mxu0 0.0
    %2622 = vmatpush1.msra.mxu0 0.0
    %2623 = vmatprep.subr.mxu0 0.0
    %2624 = vmatpush1.msra.mxu0 %v2061
    %2625 = vmatprep.subr.mxu0 0.0
    %2626 = vmatpush1.msra.mxu0 %v2056
    %2627 = vmatprep.subr.mxu0 0.0
    %2628 = vmatpush2.msra.mxu0 0.0
    %2629 = vmatprep.subr.mxu0 0.0
    %2630 = vmatpush2.msra.mxu0 0.0
    %2631 = vmatprep.subr.mxu0 0.0
    %2632 = vmatpush2.msra.mxu0 0.0
    %2633 = vmatprep.subr.mxu0 0.0
    %2634 = vmatpush2.msra.mxu0 0.0
    %2635 = vmatprep.subr.mxu0 0.0
    %2636 = vmatpush2.msra.mxu0 0.0
    %2637 = vmatprep.subr.mxu0 0.0
    %2638 = vmatpush2.msra.mxu0 0.0
    %2639 = vmatprep.subr.mxu0 0.0
    %2640 = vmatpush2.msra.mxu0 0.0
    %2641 = vmatprep.subr.mxu0 0.0
    %2642 = vmatpush2.msra.mxu0 0.0
    %2643 = vmatprep.subr.mxu0 0.0
    %2644 = vmatpush2.msra.mxu0 0.0
    %2645 = vmatprep.subr.mxu0 0.0
    %2646 = vmatpush2.msra.mxu0 0.0
    %2647 = vmatprep.subr.mxu0 0.0
    %2648 = vmatpush2.msra.mxu0 0.0
    %2649 = vmatprep.subr.mxu0 0.0
    %2650 = vmatpush2.msra.mxu0 0.0
    %2651 = vmatprep.subr.mxu0 0.0
    %2652 = vmatpush2.msra.mxu0 0.0
    %2653 = vmatprep.subr.mxu0 0.0
    %2654 = vmatpush2.msra.mxu0 0.0
    %2655 = vmatprep.subr.mxu0 0.0
    %2656 = vmatpush2.msra.mxu0 0.0
    %2657 = vmatprep.subr.mxu0 0.0
    %2658 = vmatpush2.msra.mxu0 0.0
    %2659 = vmatprep.mubr.f32.mxu0 0.0
    %2660 = vmatmul.mubr.f32.gmra.mxu0 %v732
    %v2661 = vpop.f32.mrf.mxu0
    %v2662 = vadd.f32 0.0, %v2661
    %v2663 = vpop.f32.mrf.mxu0
    %2664 = vmatprep.mubr.f32.mxu0 0.0
    %2665 = vmatmul.mubr.f32.gmra.mxu0 %v735
    %v2666 = vpop.f32.mrf.mxu0
    %v2667 = vadd.f32 0.0, %v2666
    %v2668 = vpop.f32.mrf.mxu0
    %2669 = vdwg.mxu0
    %2670 = vmatprep.subr.mxu0 0.0
    %2671 = vmatpush1.msra.mxu0 0.0
    %2672 = vmatprep.subr.mxu0 0.0
    %2673 = vmatpush1.msra.mxu0 0.0
    %2674 = vmatprep.subr.mxu0 0.0
    %2675 = vmatpush1.msra.mxu0 0.0
    %2676 = vmatprep.subr.mxu0 0.0
    %2677 = vmatpush1.msra.mxu0 0.0
    %2678 = vmatprep.subr.mxu0 0.0
    %2679 = vmatpush1.msra.mxu0 0.0
    %2680 = vmatprep.subr.mxu0 0.0
    %2681 = vmatpush1.msra.mxu0 0.0
    %2682 = vmatprep.subr.mxu0 0.0
    %2683 = vmatpush1.msra.mxu0 0.0
    %2684 = vmatprep.subr.mxu0 0.0
    %2685 = vmatpush1.msra.mxu0 0.0
    %2686 = vmatprep.subr.mxu0 0.0
    %2687 = vmatpush1.msra.mxu0 0.0
    %2688 = vmatprep.subr.mxu0 0.0
    %2689 = vmatpush1.msra.mxu0 0.0
    %2690 = vmatprep.subr.mxu0 0.0
    %2691 = vmatpush1.msra.mxu0 0.0
    %2692 = vmatprep.subr.mxu0 0.0
    %2693 = vmatpush1.msra.mxu0 0.0
    %2694 = vmatprep.subr.mxu0 0.0
    %2695 = vmatpush1.msra.mxu0 0.0
    %2696 = vmatprep.subr.mxu0 0.0
    %2697 = vmatpush1.msra.mxu0 0.0
    %2698 = vmatprep.subr.mxu0 0.0
    %2699 = vmatpush1.msra.mxu0 %v2142
    %2700 = vmatprep.subr.mxu0 0.0
    %2701 = vmatpush1.msra.mxu0 %v2137
    %2702 = vmatprep.subr.mxu0 0.0
    %2703 = vmatpush2.msra.mxu0 0.0
    %2704 = vmatprep.subr.mxu0 0.0
    %2705 = vmatpush2.msra.mxu0 0.0
    %2706 = vmatprep.subr.mxu0 0.0
    %2707 = vmatpush2.msra.mxu0 0.0
    %2708 = vmatprep.subr.mxu0 0.0
    %2709 = vmatpush2.msra.mxu0 0.0
    %2710 = vmatprep.subr.mxu0 0.0
    %2711 = vmatpush2.msra.mxu0 0.0
    %2712 = vmatprep.subr.mxu0 0.0
    %2713 = vmatpush2.msra.mxu0 0.0
    %2714 = vmatprep.subr.mxu0 0.0
    %2715 = vmatpush2.msra.mxu0 0.0
    %2716 = vmatprep.subr.mxu0 0.0
    %2717 = vmatpush2.msra.mxu0 0.0
    %2718 = vmatprep.subr.mxu0 0.0
    %2719 = vmatpush2.msra.mxu0 0.0
    %2720 = vmatprep.subr.mxu0 0.0
    %2721 = vmatpush2.msra.mxu0 0.0
    %2722 = vmatprep.subr.mxu0 0.0
    %2723 = vmatpush2.msra.mxu0 0.0
    %2724 = vmatprep.subr.mxu0 0.0
    %2725 = vmatpush2.msra.mxu0 0.0
    %2726 = vmatprep.subr.mxu0 0.0
    %2727 = vmatpush2.msra.mxu0 0.0
    %2728 = vmatprep.subr.mxu0 0.0
    %2729 = vmatpush2.msra.mxu0 0.0
    %2730 = vmatprep.subr.mxu0 0.0
    %2731 = vmatpush2.msra.mxu0 0.0
    %2732 = vmatprep.subr.mxu0 0.0
    %2733 = vmatpush2.msra.mxu0 0.0
    %2734 = vmatprep.mubr.f32.mxu0 0.0
    %2735 = vmatmul.mubr.f32.gmra.mxu0 %v732
    %v2736 = vpop.f32.mrf.mxu0
    %v2737 = vadd.f32 0.0, %v2736
    %v2738 = vpop.f32.mrf.mxu0
    %2739 = vmatprep.mubr.f32.mxu0 0.0
    %2740 = vmatmul.mubr.f32.gmra.mxu0 %v735
    %v2741 = vpop.f32.mrf.mxu0
    %v2742 = vadd.f32 0.0, %v2741
    %v2743 = vpop.f32.mrf.mxu0
    %2744 = vdwg.mxu0
    %v2745 = vmul.f32 %v2212, %v1481
    %v2746 = vmul.f32 %v2217, %v1482
    %v2747 = vmul.f32 %v2287, %v1483
    %v2748 = vmul.f32 %v2292, %v1484
    %v2749 = vmul.f32 %v2362, %v1485
    %v2750 = vmul.f32 %v2367, %v1486
    %v2751 = vmul.f32 %v2437, %v1487
    %v2752 = vmul.f32 %v2442, %v1488
    %v2753 = vmul.f32 %v2512, %v1489
    %v2754 = vmul.f32 %v2517, %v1490
    %v2755 = vmul.f32 %v2587, %v1491
    %v2756 = vmul.f32 %v2592, %v1492
    %v2757 = vmul.f32 %v2662, %v1493
    %v2758 = vmul.f32 %v2667, %v1494
    %v2759 = vmul.f32 %v2737, %v1495
    %v2760 = vmul.f32 %v2742, %v1496
    %v2761 = vsub.f32 1.0, %v2212
    %v2762 = vsub.f32 1.0, %v2217
    %v2763 = vsub.f32 1.0, %v2287
    %v2764 = vsub.f32 1.0, %v2292
    %v2765 = vsub.f32 1.0, %v2362
    %v2766 = vsub.f32 1.0, %v2367
    %v2767 = vsub.f32 1.0, %v2437
    %v2768 = vsub.f32 1.0, %v2442
    %v2769 = vsub.f32 1.0, %v2512
    %v2770 = vsub.f32 1.0, %v2517
    %v2771 = vsub.f32 1.0, %v2587
    %v2772 = vsub.f32 1.0, %v2592
    %v2773 = vsub.f32 1.0, %v2662
    %v2774 = vsub.f32 1.0, %v2667
    %v2775 = vsub.f32 1.0, %v2737
    %v2776 = vsub.f32 1.0, %v2742
    %v2777 = vmul.f32 %v2761, %v56
    %v2778 = vmul.f32 %v2762, %v57
    %v2779 = vmul.f32 %v2763, %v58
    %v2780 = vmul.f32 %v2764, %v59
    %v2781 = vmul.f32 %v2765, %v60
    %v2782 = vmul.f32 %v2766, %v61
    %v2783 = vmul.f32 %v2767, %v62
    %v2784 = vmul.f32 %v2768, %v63
    %v2785 = vmul.f32 %v2769, %v64
    %v2786 = vmul.f32 %v2770, %v65
    %v2787 = vmul.f32 %v2771, %v66
    %v2788 = vmul.f32 %v2772, %v67
    %v2789 = vmul.f32 %v2773, %v68
    %v2790 = vmul.f32 %v2774, %v69
    %v2791 = vmul.f32 %v2775, %v70
    %v2792 = vmul.f32 %v2776, %v71
    %v2793 = vadd.f32 %v2745, %v2777
    %v2794 = vadd.f32 %v2746, %v2778
    %v2795 = vadd.f32 %v2747, %v2779
    %v2796 = vadd.f32 %v2748, %v2780
    %v2797 = vadd.f32 %v2749, %v2781
    %v2798 = vadd.f32 %v2750, %v2782
    %v2799 = vadd.f32 %v2751, %v2783
    %v2800 = vadd.f32 %v2752, %v2784
    %v2801 = vadd.f32 %v2753, %v2785
    %v2802 = vadd.f32 %v2754, %v2786
    %v2803 = vadd.f32 %v2755, %v2787
    %v2804 = vadd.f32 %v2756, %v2788
    %v2805 = vadd.f32 %v2757, %v2789
    %v2806 = vadd.f32 %v2758, %v2790
    %v2807 = vadd.f32 %v2759, %v2791
    %v2808 = vadd.f32 %v2760, %v2792
    %2809 = vst.msk [vmem:[#allocation8] sm:$0xff] %vm76, %v2793
    %2810 = vst.msk [vmem:[#allocation8 + $0x8] sm:$0xff] %vm76, %v2794
    %2811 = vst.msk [vmem:[#allocation8 + $0x10] sm:$0xff] %vm76, %v2795
    %2812 = vst.msk [vmem:[#allocation8 + $0x18] sm:$0xff] %vm76, %v2796
    %2813 = vst.msk [vmem:[#allocation8 + $0x20] sm:$0xff] %vm76, %v2797
    %2814 = vst.msk [vmem:[#allocation8 + $0x28] sm:$0xff] %vm76, %v2798
    %2815 = vst.msk [vmem:[#allocation8 + $0x30] sm:$0xff] %vm76, %v2799
    %2816 = vst.msk [vmem:[#allocation8 + $0x38] sm:$0xff] %vm76, %v2800
    %2817 = vst.msk [vmem:[#allocation8 + $0x40] sm:$0xff] %vm76, %v2801
    %2818 = vst.msk [vmem:[#allocation8 + $0x48] sm:$0xff] %vm76, %v2802
    %2819 = vst.msk [vmem:[#allocation8 + $0x50] sm:$0xff] %vm76, %v2803
    %2820 = vst.msk [vmem:[#allocation8 + $0x58] sm:$0xff] %vm76, %v2804
    %2821 = vst.msk [vmem:[#allocation8 + $0x60] sm:$0xff] %vm76, %v2805
    %2822 = vst.msk [vmem:[#allocation8 + $0x68] sm:$0xff] %vm76, %v2806
    %2823 = vst.msk [vmem:[#allocation8 + $0x70] sm:$0xff] %vm76, %v2807
    %2824 = vst.msk [vmem:[#allocation8 + $0x78] sm:$0xff] %vm76, %v2808
    // Predicated region
    $region26: #{tpu_custom_call.1} parent=1 // pred_check
      _
    $region27: #{tpu_custom_call.1} parent=1 // pred_check_branch
      %2826 = sbr.rel (0) target = $region29
    $region28: #{tpu_custom_call.1} parent=1 // pred_region
      %s2828 = ssub.s32 2048, 2048
      %2829 = vsyncadd [#allocation4], %s2828
      %s2830 = sshll.u32 [#allocation8], 4
      %s2831 = int_to_ptr.vmem [resolvable:$true] %s2830
      %2836 = dma.vmem_to_hbm [thread:$0]  %s2831, 2048, %s3, [#allocation4], 128, 128, 8
    $region29: #{tpu_custom_call.1} parent=1 // pred_fallthru
      _
    // Predicated region
    $region30: #{tpu_custom_call.1} parent=1 // pred_check
      _
    $region31: #{tpu_custom_call.1} parent=1 // pred_check_branch
      %2838 = sbr.rel (0) target = $region33
    $region32: #{tpu_custom_call.1} parent=1 // pred_region
      %2839 = dma.done [#allocation4], 2048
    $region33: #{tpu_custom_call.1} parent=1 // pred_fallthru
      _
    %2840 = vsyncpa [#allocation3], 1
    %2841 = vsyncpa [#allocation6], 1
    %2842 = vsyncpa [#allocation4], 1

</llo_original>
